<compile_context>
chip_gen: v7x
topology: tpu7x:2x2x1
jax: 0.10.0
libtpu: 0.0.40
codegen_flags: <defaults>
</compile_context>

<pallas_src>
import functools

import jax
import jax.numpy as jnp
from jax.experimental import pallas as pl
from jax.experimental.pallas import tpu as pltpu


# ---------------------------------------------------------------------------
# In-kernel helper: zero-filled shift along the (flattened-spatial) lane axis.
#   y[:, p] = x[:, p + off]  if 0 <= p + off < S else 0
# ---------------------------------------------------------------------------
def _shift_lanes(x, off):
    c, s = x.shape
    if off == 0:
        return x
    if off > 0:
        return jnp.concatenate([x[:, off:], jnp.zeros((c, off), x.dtype)], axis=1)
    return jnp.concatenate([jnp.zeros((c, -off), x.dtype), x[:, :s + off]], axis=1)


# ---------------------------------------------------------------------------
# Fused kernel: conv1(s2)+SiLU -> conv2(s1, quant folded) -> split -> sample
# One grid step processes `bt` batch elements; everything stays in VMEM.
# ---------------------------------------------------------------------------
def _stage1_fused_kernel(x1_ref, eps_ref, mask_ref, w1_ref, b1_ref, w2_ref,
                         b2_ref, z_ref, *, bt, latent, wo):
    """Ref shapes (per grid step):
      x1_ref  : (bt, cin*9, S)  im2col'd stride-2 conv1 taps, S = Ho*Wo
      eps_ref : (bt, latent, S) N(0,1) noise
      mask_ref: (9, 1, S)       conv2 halo-validity masks (constant, loaded once)
      w1_ref  : (ch, cin*9)     conv1 weights as a matmul LHS
      b1_ref  : (ch, 1)
      w2_ref  : (2L, 9*ch)      conv2 weights with quant_conv folded in
      b2_ref  : (2L, 1)
      z_ref   : (bt, latent, S) latent sample
    """
    w1 = w1_ref[...]
    b1 = b1_ref[...]
    w2 = w2_ref[...]
    b2 = b2_ref[...]

    for b in range(bt):  # bt is small & static; unrolled
        x1 = x1_ref[b].astype(jnp.float32)                       # (cin*9, S)

        # ---- conv1 (stride 2, pad 1) on the MXU, then SiLU --------------------
        h = jnp.dot(w1, x1, preferred_element_type=jnp.float32,
                    precision=jax.lax.Precision.HIGHEST) + b1     # (ch, S)
        h = h * jax.nn.sigmoid(h)                                 # SiLU

        # ---- conv2 (stride 1, pad 1) with quant_conv folded in ----------------
        # Build the 9 shifted / boundary-masked copies of h (lane-dense) and do a
        # single (2L, 9*ch) @ (9*ch, S) matmul.
        taps = []
        for kh in range(3):
            for kw in range(3):
                off = (kh - 1) * wo + (kw - 1)
                sh = _shift_lanes(h, off)
                if not (kh == 1 and kw == 1):                     # center tap: all valid
                    sh = sh * mask_ref[kh * 3 + kw]               # (1, S) broadcast
                taps.append(sh)
        stack = jnp.concatenate(taps, axis=0)                     # (9*ch, S)
        q = jnp.dot(w2, stack, preferred_element_type=jnp.float32,
                    precision=jax.lax.Precision.HIGHEST) + b2     # (2L, S)

        # ---- split -> DiagonalGaussian.sample ----------------------------------
        mean = q[:latent]
        logvar = jnp.clip(q[latent:], -30.0, 20.0)
        z = mean + jnp.exp(0.5 * logvar) * eps_ref[b].astype(jnp.float32)
        z_ref[b] = z.astype(z_ref.dtype)


# ---------------------------------------------------------------------------
# Parameters for the synthetic stage-1 encoder
# ---------------------------------------------------------------------------
def init_params(key, hidden=8, latent=4):
    k1, k2, k3, k4, k5, k6 = jax.random.split(key, 6)
    s = 0.05
    return {
        "conv1_w": s * jax.random.normal(k1, (3, 3, 3, hidden), jnp.float32),
        "conv1_b": s * jax.random.normal(k2, (hidden,), jnp.float32),
        "conv2_w": s * jax.random.normal(k3, (3, 3, hidden, 2 * latent), jnp.float32),
        "conv2_b": s * jax.random.normal(k4, (2 * latent,), jnp.float32),
        "quant_w": s * jax.random.normal(k5, (1, 1, 2 * latent, 2 * latent), jnp.float32),
        "quant_b": s * jax.random.normal(k6, (2 * latent,), jnp.float32),
    }


# ---------------------------------------------------------------------------
# Stage1Wrapper.forward
# ---------------------------------------------------------------------------
@functools.partial(jax.jit, static_argnames=("stack_input_to_rgb", "latent"))
def stage1_wrapper_forward(params, x_nchw, eps_key, *, stack_input_to_rgb=True, latent=4):
    """Mirrors Stage1Wrapper.forward. x_nchw: (N, C, H, W) float32. Returns z in NCHW."""
    N, C, H, W = x_nchw.shape
    assert H % 2 == 0 and W % 2 == 0 and H >= 4 and W >= 4, "even spatial dims >= 4 expected"

    w1 = params["conv1_w"]                                   # (3, 3, 3, Ch) HWIO
    if C == 1 and stack_input_to_rgb:
        # torch.cat((x, x, x), dim=1) followed by conv1 == conv1 with input-channel
        # weights summed: fold it, so the input is never replicated in HBM.
        w1 = jnp.sum(w1, axis=2, keepdims=True)              # (3, 3, 1, Ch)
    cin = w1.shape[2]
    assert cin == C, "input channels do not match conv1 weights"
    ch = w1.shape[3]
    two_l = 2 * latent

    Ho, Wo = H // 2, W // 2                  # conv1 output size (k=3, s=2, p=1)
    S = Ho * Wo

    # --- conv1 im2col (stride-2, pad-1 taps per output pixel) -------------------
    # Gives lane-dense (cin*9, S) rows so the kernel's conv1 is one MXU matmul.
    # TODO(synk): for very large images, move this im2col in-kernel and add a
    # row-stripe spatial grid axis (with a 1-row halo) to avoid this extra HBM
    # pass and to keep per-step VMEM under v7x's 64 MiB.
    xpad = jnp.pad(x_nchw, ((0, 0), (0, 0), (1, 1), (1, 1)))
    taps = [xpad[:, :, kh:kh + 2 * Ho:2, kw:kw + 2 * Wo:2]
            for kh in range(3) for kw in range(3)]
    x1 = jnp.stack(taps, axis=2).reshape(N, cin * 9, S).astype(jnp.float32)

    # --- fold quant_conv (1x1) into conv2 (both linear -> exact) ----------------
    wq = params["quant_w"][0, 0]                             # (2L, 2L)
    w_eff = jnp.einsum("hwim,mo->hwio", params["conv2_w"], wq)
    b_eff = params["conv2_b"] @ wq + params["quant_b"]

    # Weight matrices in the exact row orders the kernel uses.
    w1m = jnp.transpose(w1, (3, 2, 0, 1)).reshape(ch, cin * 9)      # [co, ci*9 + t]
    w2m = jnp.transpose(w_eff, (3, 0, 1, 2)).reshape(two_l, 9 * ch)  # [co, t*ch + ci]
    b1m = params["conv1_b"].reshape(ch, 1)
    b2m = b_eff.reshape(two_l, 1)

    # --- conv2 halo-validity masks over the flattened spatial axis --------------
    pos = jnp.arange(S)
    ii, jj = pos // Wo, pos % Wo
    masks = jnp.stack([
        ((ii + (kh - 1) >= 0) & (ii + (kh - 1) < Ho) &
         (jj + (kw - 1) >= 0) & (jj + (kw - 1) < Wo))
        for kh in range(3) for kw in range(3)
    ]).astype(jnp.float32).reshape(9, 1, S)

    # TODO(synk): eps could be generated in-kernel with pltpu.prng_* to drop one
    # HBM read, but that changes the random stream vs. the jax.random reference.
    eps = jax.random.normal(eps_key, (N, latent, Ho, Wo), jnp.float32).reshape(N, latent, S)

    # --- batch blocking: amortize per-step overhead, keep grid >= 2 for v7x -----
    per_img_bytes = (cin * 9 + 2 * latent) * S * 4
    cap = max(1, (512 * 1024) // per_img_bytes)
    bt = 1
    for cand in range(1, N + 1):
        if N % cand == 0 and cand <= cap and (N // cand >= 2 or N == 1):
            bt = cand
    grid = N // bt

    const_bytes = (9 * S + ch * cin * 9 + ch + two_l * 9 * ch + two_l) * 4
    vmem_est = 2 * 2 * bt * per_img_bytes + const_bytes + 24 * ch * S * 4
    vmem_limit = int(min(max(4 * vmem_est, 16 << 20), 64 << 20))

    kernel = functools.partial(_stage1_fused_kernel, bt=bt, latent=latent, wo=Wo)
    z = pl.pallas_call(
        kernel,
        out_shape=jax.ShapeDtypeStruct((N, latent, S), x_nchw.dtype),
        grid=(grid,),
        in_specs=[
            pl.BlockSpec((bt, cin * 9, S), lambda n: (n, 0, 0)),
            pl.BlockSpec((bt, latent, S), lambda n: (n, 0, 0)),
            pl.BlockSpec((9, 1, S), lambda n: (0, 0, 0)),        # constant: DMA'd once
            pl.BlockSpec((ch, cin * 9), lambda n: (0, 0)),
            pl.BlockSpec((ch, 1), lambda n: (0, 0)),
            pl.BlockSpec((two_l, 9 * ch), lambda n: (0, 0)),
            pl.BlockSpec((two_l, 1), lambda n: (0, 0)),
        ],
        out_specs=pl.BlockSpec((bt, latent, S), lambda n: (n, 0, 0)),
        compiler_params=pltpu.CompilerParams(
            dimension_semantics=("parallel",),
            vmem_limit_bytes=vmem_limit),
    )(x1, eps, masks, w1m, b1m, w2m, b2m)

    # Free row-major reshape back to NCHW.
    return z.reshape(N, latent, Ho, Wo)


# ---------------------------------------------------------------------------
# Plain-JAX reference for correctness checking
# ---------------------------------------------------------------------------
def _conv_ref(x_nchw, w_hwio, b, stride, padding, silu):
    out = jax.lax.conv_general_dilated(
        x_nchw, w_hwio, (stride, stride),
        [(padding, padding), (padding, padding)],
        dimension_numbers=("NCHW", "HWIO", "NCHW"),
        precision=jax.lax.Precision.HIGHEST)
    out = out + b[None, :, None, None]
    if silu:
        out = out * jax.nn.sigmoid(out)
    return out


def _stage1_ref(params, x_rgb_nchw, eps, latent=4):
    h = _conv_ref(x_rgb_nchw, params["conv1_w"], params["conv1_b"], 2, 1, True)
    h = _conv_ref(h, params["conv2_w"], params["conv2_b"], 1, 1, False)
    m = _conv_ref(h, params["quant_w"], params["quant_b"], 1, 0, False)
    mean, logvar = m[:, :latent], m[:, latent:]
    std = jnp.exp(0.5 * jnp.clip(logvar, -30.0, 20.0))
    return mean + std * eps


if __name__ == "__main__":
    key = jax.random.PRNGKey(0)
    pkey, xkey, ekey, x3key, e3key = jax.random.split(key, 5)

    params = init_params(pkey, hidden=8, latent=4)

    # --- grayscale input: exercises the stack_input_to_rgb branch -------------
    x = jax.random.normal(xkey, (2, 1, 16, 16), jnp.float32)           # NCHW
    z = stage1_wrapper_forward(params, x, ekey, stack_input_to_rgb=True, latent=4)
    z = jax.block_until_ready(z)
    assert z.shape == (2, 4, 8, 8), z.shape

    eps = jax.random.normal(ekey, (2, 4, 8, 8), jnp.float32)
    z_ref = _stage1_ref(params, jnp.concatenate((x, x, x), axis=1), eps, latent=4)
    assert jnp.allclose(z, z_ref, atol=2e-3, rtol=2e-3), "grayscale path mismatch"

    # --- 3-channel input: no stacking ------------------------------------------
    x3 = jax.random.normal(x3key, (2, 3, 16, 16), jnp.float32)
    z3 = stage1_wrapper_forward(params, x3, e3key, stack_input_to_rgb=True, latent=4)
    z3 = jax.block_until_ready(z3)
    eps3 = jax.random.normal(e3key, (2, 4, 8, 8), jnp.float32)
    z3_ref = _stage1_ref(params, x3, eps3, latent=4)
    assert jnp.allclose(z3, z3_ref, atol=2e-3, rtol=2e-3), "rgb path mismatch"

    print("KERNEL_OK")
</pallas_src>

<mosaic_0001>
module attributes {stable_mosaic.version = 11 : i64} {
  func.func @_stage1_fused_kernel(%arg0: i32, %arg1: memref<1x9x64xf32, #tpu.memory_space<vmem>>, %arg2: memref<1x4x64xf32, #tpu.memory_space<vmem>>, %arg3: memref<9x1x64xf32, #tpu.memory_space<vmem>>, %arg4: memref<8x9xf32, #tpu.memory_space<vmem>>, %arg5: memref<8x1xf32, #tpu.memory_space<vmem>>, %arg6: memref<8x72xf32, #tpu.memory_space<vmem>>, %arg7: memref<8x1xf32, #tpu.memory_space<vmem>>, %arg8: memref<1x4x64xf32, #tpu.memory_space<vmem>>) attributes {dimension_semantics = [#tpu.dimension_semantics<parallel>], iteration_bounds = array<i64: 2>, scalar_prefetch = 0 : i64, scratch_operands = 0 : i64, tpu.core_type = #tpu.core_type<tc>, window_params = [{transform_indices = @transform_0, window_bounds = array<i64: 1, 9, 64>}, {transform_indices = @transform_1, window_bounds = array<i64: 1, 4, 64>}, {pipeline_mode = #tpu.pipeline_mode<synchronous>, transform_indices = @transform_2, window_bounds = array<i64: 9, 1, 64>}, {pipeline_mode = #tpu.pipeline_mode<synchronous>, transform_indices = @transform_3, window_bounds = array<i64: 8, 9>}, {pipeline_mode = #tpu.pipeline_mode<synchronous>, transform_indices = @transform_4, window_bounds = array<i64: 8, 1>}, {pipeline_mode = #tpu.pipeline_mode<synchronous>, transform_indices = @transform_5, window_bounds = array<i64: 8, 72>}, {pipeline_mode = #tpu.pipeline_mode<synchronous>, transform_indices = @transform_6, window_bounds = array<i64: 8, 1>}, {transform_indices = @transform_7, window_bounds = array<i64: 1, 4, 64>}]} {
    %c0 = arith.constant 0 : index
    %c0_0 = arith.constant 0 : index
    %0 = vector.load %arg4[%c0, %c0_0] : memref<8x9xf32, #tpu.memory_space<vmem>>, vector<8x9xf32>
    %c0_1 = arith.constant 0 : index
    %c0_2 = arith.constant 0 : index
    %1 = vector.load %arg5[%c0_1, %c0_2] : memref<8x1xf32, #tpu.memory_space<vmem>>, vector<8x1xf32>
    %c0_3 = arith.constant 0 : index
    %c0_4 = arith.constant 0 : index
    %2 = vector.load %arg6[%c0_3, %c0_4] : memref<8x72xf32, #tpu.memory_space<vmem>>, vector<8x72xf32>
    %c0_5 = arith.constant 0 : index
    %c0_6 = arith.constant 0 : index
    %3 = vector.load %arg7[%c0_5, %c0_6] : memref<8x1xf32, #tpu.memory_space<vmem>>, vector<8x1xf32>
    %c0_7 = arith.constant 0 : index
    %c0_8 = arith.constant 0 : index
    %c0_9 = arith.constant 0 : index
    %4 = vector.load %arg1[%c0_7, %c0_8, %c0_9] : memref<1x9x64xf32, #tpu.memory_space<vmem>>, vector<1x9x64xf32>
    %5 = vector.shape_cast %4 : vector<1x9x64xf32> to vector<9x64xf32>
    %cst = arith.constant dense<0.000000e+00> : vector<8x64xf32>
    %6 = tpu.matmul %0, %5, %cst {dimension_numbers = #tpu.dot_dimension_numbers<[1], [0], [0], [1], [0, 0, 1, 1], [], []>, precision = #tpu.contract_precision<fp32>} : vector<8x9xf32>, vector<9x64xf32>, vector<8x64xf32> -> vector<8x64xf32>
    %7 = vector.broadcast %1 : vector<8x1xf32> to vector<8x64xf32>
    %8 = arith.addf %6, %7 : vector<8x64xf32>
    %9 = arith.negf %8 : vector<8x64xf32>
    %10 = math.exp %9 : vector<8x64xf32>
    %cst_10 = arith.constant 1.000000e+00 : f32
    %11 = vector.broadcast %cst_10 : f32 to vector<8x64xf32>
    %12 = arith.addf %11, %10 : vector<8x64xf32>
    %13 = arith.divf %11, %12 : vector<8x64xf32>
    %14 = arith.mulf %8, %13 : vector<8x64xf32>
    %cst_11 = arith.constant 0.000000e+00 : f32
    %15 = vector.broadcast %cst_11 : f32 to vector<8x9xf32>
    %16 = vector.extract_strided_slice %14 {offsets = [0, 0], sizes = [8, 55], strides = [1, 1]} : vector<8x64xf32> to vector<8x55xf32>
    %17 = tpu.concatenate %15, %16 in 1 : vector<8x9xf32>, vector<8x55xf32> -> vector<8x64xf32>
    %c0_12 = arith.constant 0 : index
    %c0_13 = arith.constant 0 : index
    %c0_14 = arith.constant 0 : index
    %18 = vector.load %arg3[%c0_12, %c0_13, %c0_14] : memref<9x1x64xf32, #tpu.memory_space<vmem>>, vector<1x1x64xf32>
    %19 = vector.shape_cast %18 : vector<1x1x64xf32> to vector<1x64xf32>
    %20 = vector.broadcast %19 : vector<1x64xf32> to vector<8x64xf32>
    %21 = arith.mulf %17, %20 : vector<8x64xf32>
    %cst_15 = arith.constant 0.000000e+00 : f32
    %22 = vector.broadcast %cst_15 : f32 to vector<8x8xf32>
    %23 = vector.extract_strided_slice %14 {offsets = [0, 0], sizes = [8, 56], strides = [1, 1]} : vector<8x64xf32> to vector<8x56xf32>
    %24 = tpu.concatenate %22, %23 in 1 : vector<8x8xf32>, vector<8x56xf32> -> vector<8x64xf32>
    %c1 = arith.constant 1 : index
    %c0_16 = arith.constant 0 : index
    %c0_17 = arith.constant 0 : index
    %25 = vector.load %arg3[%c1, %c0_16, %c0_17] : memref<9x1x64xf32, #tpu.memory_space<vmem>>, vector<1x1x64xf32>
    %26 = vector.shape_cast %25 : vector<1x1x64xf32> to vector<1x64xf32>
    %27 = vector.broadcast %26 : vector<1x64xf32> to vector<8x64xf32>
    %28 = arith.mulf %24, %27 : vector<8x64xf32>
    %cst_18 = arith.constant 0.000000e+00 : f32
    %29 = vector.broadcast %cst_18 : f32 to vector<8x7xf32>
    %30 = vector.extract_strided_slice %14 {offsets = [0, 0], sizes = [8, 57], strides = [1, 1]} : vector<8x64xf32> to vector<8x57xf32>
    %31 = tpu.concatenate %29, %30 in 1 : vector<8x7xf32>, vector<8x57xf32> -> vector<8x64xf32>
    %c2 = arith.constant 2 : index
    %c0_19 = arith.constant 0 : index
    %c0_20 = arith.constant 0 : index
    %32 = vector.load %arg3[%c2, %c0_19, %c0_20] : memref<9x1x64xf32, #tpu.memory_space<vmem>>, vector<1x1x64xf32>
    %33 = vector.shape_cast %32 : vector<1x1x64xf32> to vector<1x64xf32>
    %34 = vector.broadcast %33 : vector<1x64xf32> to vector<8x64xf32>
    %35 = arith.mulf %31, %34 : vector<8x64xf32>
    %cst_21 = arith.constant 0.000000e+00 : f32
    %36 = vector.broadcast %cst_21 : f32 to vector<8x1xf32>
    %37 = vector.extract_strided_slice %14 {offsets = [0, 0], sizes = [8, 63], strides = [1, 1]} : vector<8x64xf32> to vector<8x63xf32>
    %38 = tpu.concatenate %36, %37 in 1 : vector<8x1xf32>, vector<8x63xf32> -> vector<8x64xf32>
    %c3 = arith.constant 3 : index
    %c0_22 = arith.constant 0 : index
    %c0_23 = arith.constant 0 : index
    %39 = vector.load %arg3[%c3, %c0_22, %c0_23] : memref<9x1x64xf32, #tpu.memory_space<vmem>>, vector<1x1x64xf32>
    %40 = vector.shape_cast %39 : vector<1x1x64xf32> to vector<1x64xf32>
    %41 = vector.broadcast %40 : vector<1x64xf32> to vector<8x64xf32>
    %42 = arith.mulf %38, %41 : vector<8x64xf32>
    %43 = vector.extract_strided_slice %14 {offsets = [0, 1], sizes = [8, 63], strides = [1, 1]} : vector<8x64xf32> to vector<8x63xf32>
    %cst_24 = arith.constant 0.000000e+00 : f32
    %44 = vector.broadcast %cst_24 : f32 to vector<8x1xf32>
    %45 = tpu.concatenate %43, %44 in 1 : vector<8x63xf32>, vector<8x1xf32> -> vector<8x64xf32>
    %c5 = arith.constant 5 : index
    %c0_25 = arith.constant 0 : index
    %c0_26 = arith.constant 0 : index
    %46 = vector.load %arg3[%c5, %c0_25, %c0_26] : memref<9x1x64xf32, #tpu.memory_space<vmem>>, vector<1x1x64xf32>
    %47 = vector.shape_cast %46 : vector<1x1x64xf32> to vector<1x64xf32>
    %48 = vector.broadcast %47 : vector<1x64xf32> to vector<8x64xf32>
    %49 = arith.mulf %45, %48 : vector<8x64xf32>
    %50 = vector.extract_strided_slice %14 {offsets = [0, 7], sizes = [8, 57], strides = [1, 1]} : vector<8x64xf32> to vector<8x57xf32>
    %cst_27 = arith.constant 0.000000e+00 : f32
    %51 = vector.broadcast %cst_27 : f32 to vector<8x7xf32>
    %52 = tpu.concatenate %50, %51 in 1 : vector<8x57xf32>, vector<8x7xf32> -> vector<8x64xf32>
    %c6 = arith.constant 6 : index
    %c0_28 = arith.constant 0 : index
    %c0_29 = arith.constant 0 : index
    %53 = vector.load %arg3[%c6, %c0_28, %c0_29] : memref<9x1x64xf32, #tpu.memory_space<vmem>>, vector<1x1x64xf32>
    %54 = vector.shape_cast %53 : vector<1x1x64xf32> to vector<1x64xf32>
    %55 = vector.broadcast %54 : vector<1x64xf32> to vector<8x64xf32>
    %56 = arith.mulf %52, %55 : vector<8x64xf32>
    %57 = vector.extract_strided_slice %14 {offsets = [0, 8], sizes = [8, 56], strides = [1, 1]} : vector<8x64xf32> to vector<8x56xf32>
    %cst_30 = arith.constant 0.000000e+00 : f32
    %58 = vector.broadcast %cst_30 : f32 to vector<8x8xf32>
    %59 = tpu.concatenate %57, %58 in 1 : vector<8x56xf32>, vector<8x8xf32> -> vector<8x64xf32>
    %c7 = arith.constant 7 : index
    %c0_31 = arith.constant 0 : index
    %c0_32 = arith.constant 0 : index
    %60 = vector.load %arg3[%c7, %c0_31, %c0_32] : memref<9x1x64xf32, #tpu.memory_space<vmem>>, vector<1x1x64xf32>
    %61 = vector.shape_cast %60 : vector<1x1x64xf32> to vector<1x64xf32>
    %62 = vector.broadcast %61 : vector<1x64xf32> to vector<8x64xf32>
    %63 = arith.mulf %59, %62 : vector<8x64xf32>
    %64 = vector.extract_strided_slice %14 {offsets = [0, 9], sizes = [8, 55], strides = [1, 1]} : vector<8x64xf32> to vector<8x55xf32>
    %cst_33 = arith.constant 0.000000e+00 : f32
    %65 = vector.broadcast %cst_33 : f32 to vector<8x9xf32>
    %66 = tpu.concatenate %64, %65 in 1 : vector<8x55xf32>, vector<8x9xf32> -> vector<8x64xf32>
    %c8 = arith.constant 8 : index
    %c0_34 = arith.constant 0 : index
    %c0_35 = arith.constant 0 : index
    %67 = vector.load %arg3[%c8, %c0_34, %c0_35] : memref<9x1x64xf32, #tpu.memory_space<vmem>>, vector<1x1x64xf32>
    %68 = vector.shape_cast %67 : vector<1x1x64xf32> to vector<1x64xf32>
    %69 = vector.broadcast %68 : vector<1x64xf32> to vector<8x64xf32>
    %70 = arith.mulf %66, %69 : vector<8x64xf32>
    %71 = tpu.concatenate %21, %28, %35, %42, %14, %49, %56, %63, %70 in 0 : vector<8x64xf32>, vector<8x64xf32>, vector<8x64xf32>, vector<8x64xf32>, vector<8x64xf32>, vector<8x64xf32>, vector<8x64xf32>, vector<8x64xf32>, vector<8x64xf32> -> vector<72x64xf32>
    %cst_36 = arith.constant dense<0.000000e+00> : vector<8x64xf32>
    %72 = tpu.matmul %2, %71, %cst_36 {dimension_numbers = #tpu.dot_dimension_numbers<[1], [0], [0], [1], [0, 0, 1, 1], [], []>, precision = #tpu.contract_precision<fp32>} : vector<8x72xf32>, vector<72x64xf32>, vector<8x64xf32> -> vector<8x64xf32>
    %73 = vector.broadcast %3 : vector<8x1xf32> to vector<8x64xf32>
    %74 = arith.addf %72, %73 : vector<8x64xf32>
    %75 = vector.extract_strided_slice %74 {offsets = [0, 0], sizes = [4, 64], strides = [1, 1]} : vector<8x64xf32> to vector<4x64xf32>
    %76 = vector.extract_strided_slice %74 {offsets = [4, 0], sizes = [4, 64], strides = [1, 1]} : vector<8x64xf32> to vector<4x64xf32>
    %cst_37 = arith.constant -3.000000e+01 : f32
    %cst_38 = arith.constant 2.000000e+01 : f32
    %77 = vector.broadcast %cst_37 : f32 to vector<4x64xf32>
    %78 = arith.maximumf %77, %76 : vector<4x64xf32>
    %79 = vector.broadcast %cst_38 : f32 to vector<4x64xf32>
    %80 = arith.minimumf %79, %78 : vector<4x64xf32>
    %cst_39 = arith.constant 5.000000e-01 : f32
    %81 = vector.broadcast %cst_39 : f32 to vector<4x64xf32>
    %82 = arith.mulf %81, %80 : vector<4x64xf32>
    %83 = math.exp %82 : vector<4x64xf32>
    %c0_40 = arith.constant 0 : index
    %c0_41 = arith.constant 0 : index
    %c0_42 = arith.constant 0 : index
    %84 = vector.load %arg2[%c0_40, %c0_41, %c0_42] : memref<1x4x64xf32, #tpu.memory_space<vmem>>, vector<1x4x64xf32>
    %85 = vector.shape_cast %84 : vector<1x4x64xf32> to vector<4x64xf32>
    %86 = arith.mulf %83, %85 : vector<4x64xf32>
    %87 = arith.addf %75, %86 : vector<4x64xf32>
    %c0_43 = arith.constant 0 : index
    %c0_44 = arith.constant 0 : index
    %c0_45 = arith.constant 0 : index
    %88 = vector.load %arg8[%c0_43, %c0_44, %c0_45] : memref<1x4x64xf32, #tpu.memory_space<vmem>>, vector<1x4x64xf32>
    %89 = vector.shape_cast %88 : vector<1x4x64xf32> to vector<4x64xf32>
    %90 = vector.shape_cast %87 : vector<4x64xf32> to vector<1x4x64xf32>
    tpu.vector_store %arg8[%c0_43, %c0_44, %c0_45], %90 {strides = array<i32>} : memref<1x4x64xf32, #tpu.memory_space<vmem>>, vector<1x4x64xf32>,
    return
  }
  func.func @transform_0(%arg0: i32) -> (i32, i32, i32) {
    %c0_i32 = arith.constant 0 : i32
    %c0_i32_0 = arith.constant 0 : i32
    %c0_i32_1 = arith.constant 0 : i32
    return %arg0, %c0_i32, %c0_i32_0 : i32, i32, i32
  }
  func.func @transform_1(%arg0: i32) -> (i32, i32, i32) {
    %c0_i32 = arith.constant 0 : i32
    %c0_i32_0 = arith.constant 0 : i32
    %c0_i32_1 = arith.constant 0 : i32
    return %arg0, %c0_i32, %c0_i32_0 : i32, i32, i32
  }
  func.func @transform_2(%arg0: i32) -> (i32, i32, i32) {
    %c0_i32 = arith.constant 0 : i32
    %c0_i32_0 = arith.constant 0 : i32
    %c0_i32_1 = arith.constant 0 : i32
    %c0_i32_2 = arith.constant 0 : i32
    return %c0_i32, %c0_i32_0, %c0_i32_1 : i32, i32, i32
  }
  func.func @transform_3(%arg0: i32) -> (i32, i32) {
    %c0_i32 = arith.constant 0 : i32
    %c0_i32_0 = arith.constant 0 : i32
    %c0_i32_1 = arith.constant 0 : i32
    return %c0_i32, %c0_i32_0 : i32, i32
  }
  func.func @transform_4(%arg0: i32) -> (i32, i32) {
    %c0_i32 = arith.constant 0 : i32
    %c0_i32_0 = arith.constant 0 : i32
    %c0_i32_1 = arith.constant 0 : i32
    return %c0_i32, %c0_i32_0 : i32, i32
  }
  func.func @transform_5(%arg0: i32) -> (i32, i32) {
    %c0_i32 = arith.constant 0 : i32
    %c0_i32_0 = arith.constant 0 : i32
    %c0_i32_1 = arith.constant 0 : i32
    return %c0_i32, %c0_i32_0 : i32, i32
  }
  func.func @transform_6(%arg0: i32) -> (i32, i32) {
    %c0_i32 = arith.constant 0 : i32
    %c0_i32_0 = arith.constant 0 : i32
    %c0_i32_1 = arith.constant 0 : i32
    return %c0_i32, %c0_i32_0 : i32, i32
  }
  func.func @transform_7(%arg0: i32) -> (i32, i32, i32) {
    %c0_i32 = arith.constant 0 : i32
    %c0_i32_0 = arith.constant 0 : i32
    %c0_i32_1 = arith.constant 0 : i32
    return %arg0, %c0_i32, %c0_i32_0 : i32, i32, i32
  }
}

</mosaic_0001>

<llo_original>
// kernel: stage1_wrapper_forward.1
$region0: #{stage1_wrapper_forward.1}
  #allocation0 [shape = 'u32[]', space=smem, size = 0x4, offset = 0x4, fixed_abs, tag = 'smem constant byte address 0x4 - core index']
  #allocation1 [shape = 'u32[144,128]{1,0:T(1,128)}', space=vmem, size = 0x12000, scoped, tag = 'internal scratch']
  %s0 = inlined_call_operand.vmem [shape: f32[2,9,64], index: 0, kind: input, shape index: {}]
  %s1 = inlined_call_operand.vmem [shape: f32[2,4,64], index: 1, kind: input, shape index: {}]
  %s2 = inlined_call_operand.vmem [shape: f32[9,1,64], index: 2, kind: input, shape index: {}]
  %s3 = inlined_call_operand.vmem [shape: f32[8,9], index: 3, kind: input, shape index: {}]
  %s4 = inlined_call_operand.vmem [shape: f32[8,1], index: 4, kind: input, shape index: {}]
  %s5 = inlined_call_operand.vmem [shape: f32[8,72], index: 5, kind: input, shape index: {}]
  %s6 = inlined_call_operand.vmem [shape: f32[8,1], index: 6, kind: input, shape index: {}]
  %s7 = inlined_call_operand.vmem [shape: f32[2,4,64], index: 7, kind: output, shape index: {}]
  %s8 = sld [smem:[#allocation0]]
  $region61: #{stage1_wrapper_forward.1} parent=0
    _
  %s10 = ssub.s32 1, %s8
  %s11 = scalar_select 0, %s10, %s8
  loop: start=0, step=1, limit=4
  $region2: #{stage1_wrapper_forward.1} parent=0 // loop_pre_header
    _
  $region3: #{stage1_wrapper_forward.1} parent=0 // loop_header
    %s13 = sphi 0, %s17
    %p14 = scmp.ge.s32.totalorder %s13, 4
    %s23 = sphi 0, %s25
    %s26 = sphi 0, %s23
    %s27 = sphi 0, %s26
    %s43 = sphi 0, %s27
    %s49 = sphi 0, %s51
    %s52 = sphi 0, %s49
    %s53 = sphi 0, %s52
    %s69 = sphi 0, %s53
    %s73 = sphi 0, %s73
    %s75 = sphi 0, %s73
    %s76 = sphi 0, %s75
    %s90 = sphi 0, %s76
    %s94 = sphi 0, %s94
    %s96 = sphi 0, %s94
    %s97 = sphi 0, %s96
    %s111 = sphi 0, %s97
    %s115 = sphi 0, %s115
    %s117 = sphi 0, %s115
    %s118 = sphi 0, %s117
    %s132 = sphi 0, %s118
    %s136 = sphi 0, %s136
    %s138 = sphi 0, %s136
    %s139 = sphi 0, %s138
    %s153 = sphi 0, %s139
    %s157 = sphi 0, %s157
    %s159 = sphi 0, %s157
    %s160 = sphi 0, %s159
    %s174 = sphi 0, %s160
    %s180 = sphi 0, %s182
    %s183 = sphi 0, %s180
    %s184 = sphi 0, %s183
    %s200 = sphi 0, %s184
  $region4: #{stage1_wrapper_forward.1} parent=0 // loop_header_branch
    %16 = sbr.rel (%p14) target = $region8
  $region5: #{stage1_wrapper_forward.1} parent=0 // loop_body
    %s18 = ssub.s32 %s13, 1
    %s19 = ssub.s32 %s13, 2
    %s20 = sadd.s32 %s13, 1
    %s21 = ssub.s32 %s13, %s20
    %p22 = scmp.eq.s32.totalorder %s21, 0
    %s24 = sadd.s32 %s23, 1
    %s25 = scalar_select %p22, %s23, %s24
    %p28 = pneg %p22
    %p29 = scmp.eq.s32.totalorder %s13, 1
    %p30 = por %p28, %p29
    %p31 = scmp.ne.s32.totalorder %s23, %s26
    %p32 = scmp.eq.s32.totalorder %s13, 0
    %p33 = por %p31, %p32
    %p34 = scmp.ne.s32.totalorder %s23, %s26
    %p35 = scmp.eq.s32.totalorder %s18, 1
    %p36 = por %p34, %p35
    %p37 = scmp.ne.s32.totalorder %s26, %s27
    %p38 = scmp.eq.s32.totalorder %s18, 0
    %p39 = por %p37, %p38
    %p40 = scmp.ne.s32.totalorder %s26, %s27
    %p41 = scmp.eq.s32.totalorder %s19, 1
    %p42 = por %p40, %p41
    %p44 = scmp.ne.s32.totalorder %s27, %s43
    %p45 = scmp.eq.s32.totalorder %s19, 0
    %p46 = por %p44, %p45
    %s47 = ssub.s32 %s13, %s20
    %p48 = scmp.eq.s32.totalorder %s47, 0
    %s50 = sadd.s32 %s49, 1
    %s51 = scalar_select %p48, %s49, %s50
    %p54 = pneg %p48
    %p55 = scmp.eq.s32.totalorder %s13, 1
    %p56 = por %p54, %p55
    %p57 = scmp.ne.s32.totalorder %s49, %s52
    %p58 = scmp.eq.s32.totalorder %s13, 0
    %p59 = por %p57, %p58
    %p60 = scmp.ne.s32.totalorder %s49, %s52
    %p61 = scmp.eq.s32.totalorder %s18, 1
    %p62 = por %p60, %p61
    %p63 = scmp.ne.s32.totalorder %s52, %s53
    %p64 = scmp.eq.s32.totalorder %s18, 0
    %p65 = por %p63, %p64
    %p66 = scmp.ne.s32.totalorder %s52, %s53
    %p67 = scmp.eq.s32.totalorder %s19, 1
    %p68 = por %p66, %p67
    %p70 = scmp.ne.s32.totalorder %s53, %s69
    %p71 = scmp.eq.s32.totalorder %s19, 0
    %p72 = por %p70, %p71
    %s74 = sadd.s32 %s73, 1
    %p77 = scmp.eq.s32.totalorder %s13, 1
    %p78 = scmp.ne.s32.totalorder %s73, %s75
    %p79 = scmp.eq.s32.totalorder %s13, 0
    %p80 = por %p78, %p79
    %p81 = scmp.ne.s32.totalorder %s73, %s75
    %p82 = scmp.eq.s32.totalorder %s18, 1
    %p83 = por %p81, %p82
    %p84 = scmp.ne.s32.totalorder %s75, %s76
    %p85 = scmp.eq.s32.totalorder %s18, 0
    %p86 = por %p84, %p85
    %p87 = scmp.ne.s32.totalorder %s75, %s76
    %p88 = scmp.eq.s32.totalorder %s19, 1
    %p89 = por %p87, %p88
    %p91 = scmp.ne.s32.totalorder %s76, %s90
    %p92 = scmp.eq.s32.totalorder %s19, 0
    %p93 = por %p91, %p92
    %s95 = sadd.s32 %s94, 1
    %p98 = scmp.eq.s32.totalorder %s13, 1
    %p99 = scmp.ne.s32.totalorder %s94, %s96
    %p100 = scmp.eq.s32.totalorder %s13, 0
    %p101 = por %p99, %p100
    %p102 = scmp.ne.s32.totalorder %s94, %s96
    %p103 = scmp.eq.s32.totalorder %s18, 1
    %p104 = por %p102, %p103
    %p105 = scmp.ne.s32.totalorder %s96, %s97
    %p106 = scmp.eq.s32.totalorder %s18, 0
    %p107 = por %p105, %p106
    %p108 = scmp.ne.s32.totalorder %s96, %s97
    %p109 = scmp.eq.s32.totalorder %s19, 1
    %p110 = por %p108, %p109
    %p112 = scmp.ne.s32.totalorder %s97, %s111
    %p113 = scmp.eq.s32.totalorder %s19, 0
    %p114 = por %p112, %p113
    %s116 = sadd.s32 %s115, 1
    %p119 = scmp.eq.s32.totalorder %s13, 1
    %p120 = scmp.ne.s32.totalorder %s115, %s117
    %p121 = scmp.eq.s32.totalorder %s13, 0
    %p122 = por %p120, %p121
    %p123 = scmp.ne.s32.totalorder %s115, %s117
    %p124 = scmp.eq.s32.totalorder %s18, 1
    %p125 = por %p123, %p124
    %p126 = scmp.ne.s32.totalorder %s117, %s118
    %p127 = scmp.eq.s32.totalorder %s18, 0
    %p128 = por %p126, %p127
    %p129 = scmp.ne.s32.totalorder %s117, %s118
    %p130 = scmp.eq.s32.totalorder %s19, 1
    %p131 = por %p129, %p130
    %p133 = scmp.ne.s32.totalorder %s118, %s132
    %p134 = scmp.eq.s32.totalorder %s19, 0
    %p135 = por %p133, %p134
    %s137 = sadd.s32 %s136, 1
    %p140 = scmp.eq.s32.totalorder %s13, 1
    %p141 = scmp.ne.s32.totalorder %s136, %s138
    %p142 = scmp.eq.s32.totalorder %s13, 0
    %p143 = por %p141, %p142
    %p144 = scmp.ne.s32.totalorder %s136, %s138
    %p145 = scmp.eq.s32.totalorder %s18, 1
    %p146 = por %p144, %p145
    %p147 = scmp.ne.s32.totalorder %s138, %s139
    %p148 = scmp.eq.s32.totalorder %s18, 0
    %p149 = por %p147, %p148
    %p150 = scmp.ne.s32.totalorder %s138, %s139
    %p151 = scmp.eq.s32.totalorder %s19, 1
    %p152 = por %p150, %p151
    %p154 = scmp.ne.s32.totalorder %s139, %s153
    %p155 = scmp.eq.s32.totalorder %s19, 0
    %p156 = por %p154, %p155
    %s158 = sadd.s32 %s157, 1
    %p161 = scmp.eq.s32.totalorder %s13, 1
    %p162 = scmp.ne.s32.totalorder %s157, %s159
    %p163 = scmp.eq.s32.totalorder %s13, 0
    %p164 = por %p162, %p163
    %p165 = scmp.ne.s32.totalorder %s157, %s159
    %p166 = scmp.eq.s32.totalorder %s18, 1
    %p167 = por %p165, %p166
    %p168 = scmp.ne.s32.totalorder %s159, %s160
    %p169 = scmp.eq.s32.totalorder %s18, 0
    %p170 = por %p168, %p169
    %p171 = scmp.ne.s32.totalorder %s159, %s160
    %p172 = scmp.eq.s32.totalorder %s19, 1
    %p173 = por %p171, %p172
    %p175 = scmp.ne.s32.totalorder %s160, %s174
    %p176 = scmp.eq.s32.totalorder %s19, 0
    %p177 = por %p175, %p176
    %s178 = ssub.s32 %s13, %s20
    %p179 = scmp.eq.s32.totalorder %s178, 0
    %s181 = sadd.s32 %s180, 1
    %s182 = scalar_select %p179, %s180, %s181
    %p185 = pneg %p179
    %p186 = scmp.eq.s32.totalorder %s13, 1
    %p187 = por %p185, %p186
    %p188 = scmp.ne.s32.totalorder %s180, %s183
    %p189 = scmp.eq.s32.totalorder %s13, 0
    %p190 = por %p188, %p189
    %p191 = scmp.ne.s32.totalorder %s180, %s183
    %p192 = scmp.eq.s32.totalorder %s18, 1
    %p193 = por %p191, %p192
    %p194 = scmp.ne.s32.totalorder %s183, %s184
    %p195 = scmp.eq.s32.totalorder %s18, 0
    %p196 = por %p194, %p195
    %p197 = scmp.ne.s32.totalorder %s183, %s184
    %p198 = scmp.eq.s32.totalorder %s19, 1
    %p199 = por %p197, %p198
    %p201 = scmp.ne.s32.totalorder %s184, %s200
    %p202 = scmp.eq.s32.totalorder %s19, 0
    %p203 = por %p201, %p202
    %p204 = scmp.le.s32.totalorder 1, %s13
    %p205 = scmp.lt.s32.totalorder %s13, 3
    %p206 = pnand %p204, %p205
    %p207 = pneg %p206
    // Predicated region
    $region9: #{stage1_wrapper_forward.1} parent=5 // pred_check
      _
    $region10: #{stage1_wrapper_forward.1} parent=5 // pred_check_branch
      %209 = sbr.rel (%p206) target = $region12
    $region11: #{stage1_wrapper_forward.1} parent=5 // pred_region
      %s210 = ssub.s32 %s13, 1
      // Predicated region
      $region13: #{stage1_wrapper_forward.1} parent=11 // pred_check
        %p211 = pneg %p86
      $region14: #{stage1_wrapper_forward.1} parent=11 // pred_check_branch
        %213 = sbr.rel (%p211) target = $region16
      $region15: #{stage1_wrapper_forward.1} parent=11 // pred_region
        _
      $region16: #{stage1_wrapper_forward.1} parent=11 // pred_fallthru
        _
      // Predicated region
      $region17: #{stage1_wrapper_forward.1} parent=11 // pred_check
        %p214 = pneg %p107
      $region18: #{stage1_wrapper_forward.1} parent=11 // pred_check_branch
        %216 = sbr.rel (%p214) target = $region20
      $region19: #{stage1_wrapper_forward.1} parent=11 // pred_region
        _
      $region20: #{stage1_wrapper_forward.1} parent=11 // pred_fallthru
        _
      // Predicated region
      $region21: #{stage1_wrapper_forward.1} parent=11 // pred_check
        %p217 = pneg %p128
      $region22: #{stage1_wrapper_forward.1} parent=11 // pred_check_branch
        %219 = sbr.rel (%p217) target = $region24
      $region23: #{stage1_wrapper_forward.1} parent=11 // pred_region
        _
      $region24: #{stage1_wrapper_forward.1} parent=11 // pred_fallthru
        _
      // Predicated region
      $region25: #{stage1_wrapper_forward.1} parent=11 // pred_check
        %p220 = pneg %p149
      $region26: #{stage1_wrapper_forward.1} parent=11 // pred_check_branch
        %222 = sbr.rel (%p220) target = $region28
      $region27: #{stage1_wrapper_forward.1} parent=11 // pred_region
        _
      $region28: #{stage1_wrapper_forward.1} parent=11 // pred_fallthru
        _
      // Predicated region
      $region29: #{stage1_wrapper_forward.1} parent=11 // pred_check
        %p223 = pneg %p170
      $region30: #{stage1_wrapper_forward.1} parent=11 // pred_check_branch
        %225 = sbr.rel (%p223) target = $region32
      $region31: #{stage1_wrapper_forward.1} parent=11 // pred_region
        _
      $region32: #{stage1_wrapper_forward.1} parent=11 // pred_fallthru
        _
    $region12: #{stage1_wrapper_forward.1} parent=5 // pred_fallthru
      _
    %p226 = scmp.lt.s32.totalorder %s13, 2
    // Predicated region
    $region33: #{stage1_wrapper_forward.1} parent=5 // pred_check
      %p227 = pneg %p226
    $region34: #{stage1_wrapper_forward.1} parent=5 // pred_check_branch
      %229 = sbr.rel (%p227) target = $region36
    $region35: #{stage1_wrapper_forward.1} parent=5 // pred_region
      // Predicated region
      $region37: #{stage1_wrapper_forward.1} parent=35 // pred_check
        %p230 = pneg %p33
      $region38: #{stage1_wrapper_forward.1} parent=35 // pred_check_branch
        %232 = sbr.rel (%p230) target = $region40
      $region39: #{stage1_wrapper_forward.1} parent=35 // pred_region
        %p233 = scmp.lt.s32.totalorder %s13, 1
        %s234 = scalar_select %p233, %s13, 1
        %s235 = smul.addr %s234, 2
        %s236 = smul.addr %s235, 8
        %s237 = scalar_lea.vmem %s0, %s236
      $region40: #{stage1_wrapper_forward.1} parent=35 // pred_fallthru
        _
      // Predicated region
      $region41: #{stage1_wrapper_forward.1} parent=35 // pred_check
        %p238 = pneg %p59
      $region42: #{stage1_wrapper_forward.1} parent=35 // pred_check_branch
        %240 = sbr.rel (%p238) target = $region44
      $region43: #{stage1_wrapper_forward.1} parent=35 // pred_region
        %p241 = scmp.lt.s32.totalorder %s13, 1
        %s242 = scalar_select %p241, %s13, 1
        %s243 = smul.addr %s242, 4
        %s244 = scalar_lea.vmem %s1, %s243
      $region44: #{stage1_wrapper_forward.1} parent=35 // pred_fallthru
        _
    $region36: #{stage1_wrapper_forward.1} parent=5 // pred_fallthru
      _
    %p245 = scmp.le.s32.totalorder 1, %s13
    %p246 = scmp.lt.s32.totalorder %s13, 3
    %p247 = pnand %p245, %p246
    %p248 = pneg %p247
    // Predicated region
    $region45: #{stage1_wrapper_forward.1} parent=5 // pred_check
      _
    $region46: #{stage1_wrapper_forward.1} parent=5 // pred_check_branch
      %250 = sbr.rel (%p247) target = $region48
    $region47: #{stage1_wrapper_forward.1} parent=5 // pred_region
      %s251 = ssub.s32 %s13, 1
      %p252 = scmp.lt.s32.totalorder %s18, 1
      %s253 = scalar_select %p252, %s18, 1
      %s254 = smul.addr %s253, 2
      %s255 = smul.addr %s254, 8
      %s256 = scalar_lea.vmem %s0, %s255
      %p257 = pneg %p39
      %p258 = pneg %p36
      %p259 = scmp.lt.s32.totalorder %s18, 1
      %s260 = scalar_select %p259, %s18, 1
      %s261 = smul.addr %s260, 4
      %s262 = scalar_lea.vmem %s1, %s261
      %p263 = pneg %p65
      %p264 = pneg %p62
      %p265 = pneg %p86
      %p266 = pneg %p83
      %p267 = pneg %p107
      %p268 = pneg %p104
      %p269 = pneg %p128
      %p270 = pneg %p125
      %p271 = pneg %p149
      %p272 = pneg %p146
      %p273 = pneg %p170
      %p274 = pneg %p167
      %p275 = pneg %p196
      %p276 = pneg %p193
      %p277 = scmp.lt.s32.totalorder %s18, 1
      %s278 = scalar_select %p277, %s18, 1
      %s279 = smul.addr %s278, 4
      %s280 = scalar_lea.vmem %s7, %s279
      %p281 = scmp.lt.s32.totalorder %s18, 1
      %s282 = scalar_select %p281, %s18, 1
      %s283 = smul.addr %s282, 2
      %s284 = smul.addr %s283, 8
      %s285 = scalar_lea.vmem %s0, %s284
      %p286 = scmp.lt.s32.totalorder %s18, 1
      %s287 = scalar_select %p286, %s18, 1
      %s288 = smul.addr %s287, 4
      %s289 = scalar_lea.vmem %s1, %s288
      %p290 = scmp.lt.s32.totalorder %s18, 1
      %s291 = scalar_select %p290, %s18, 1
      %s292 = smul.addr %s291, 4
      %s293 = scalar_lea.vmem %s7, %s292
      %v294 = vld [vmem:[%s3] sm:$0xff]
      %v295 = vld [vmem:[%s4] sm:$0xff]
      %v296 = vld [vmem:[%s5] sm:$0xff]
      %v297 = vld [vmem:[%s6] sm:$0xff]
      %v298 = vld [vmem:[%s285] sm:$0xff]
      %v299 = vld [vmem:[%s285 + $0x8] sm:$0x1]
      %301 = vset.pattern.permute.xlu0 0
      %302 = vperm.xlu0 %301, %v295
      %v303 = vpop.permute.xlu0 %302
      %vm305 = vcmask 72704
      %v307 = vsel %vm305, %v294, 0
      %vm309 = vcmask 1040384
      %v311 = vsel %vm309, %v299, 0
      %313 = vmatprep.subr.mxu0 0.0
      %v314 = vand.u32 %v298, 4294901760
      %315 = vmatpush1.msra.mxu0 %v314
      %316 = vmatprep.subr.mxu0 0.0
      %v317 = vand.u32 %v311, 4294901760
      %318 = vmatpush1.msra.mxu0 %v317
      %319 = vmatprep.subr.mxu0 0.0
      %320 = vmatpush1.msra.mxu0 0.0
      %321 = vmatprep.subr.mxu0 0.0
      %322 = vmatpush1.msra.mxu0 0.0
      %323 = vmatprep.subr.mxu0 0.0
      %324 = vmatpush1.msra.mxu0 0.0
      %325 = vmatprep.subr.mxu0 0.0
      %326 = vmatpush1.msra.mxu0 0.0
      %327 = vmatprep.subr.mxu0 0.0
      %328 = vmatpush1.msra.mxu0 0.0
      %329 = vmatprep.subr.mxu0 0.0
      %330 = vmatpush1.msra.mxu0 0.0
      %331 = vmatprep.subr.mxu0 0.0
      %332 = vmatpush1.msra.mxu0 0.0
      %333 = vmatprep.subr.mxu0 0.0
      %334 = vmatpush1.msra.mxu0 0.0
      %335 = vmatprep.subr.mxu0 0.0
      %336 = vmatpush1.msra.mxu0 0.0
      %337 = vmatprep.subr.mxu0 0.0
      %338 = vmatpush1.msra.mxu0 0.0
      %339 = vmatprep.subr.mxu0 0.0
      %340 = vmatpush1.msra.mxu0 0.0
      %341 = vmatprep.subr.mxu0 0.0
      %342 = vmatpush1.msra.mxu0 0.0
      %343 = vmatprep.subr.mxu0 0.0
      %344 = vmatpush1.msra.mxu0 0.0
      %345 = vmatprep.subr.mxu0 0.0
      %346 = vmatpush1.msra.mxu0 0.0
      %347 = vmatprep.subr.mxu0 0.0
      %348 = vmatpush1.msra.mxu0 0.0
      %349 = vmatprep.subr.mxu0 0.0
      %350 = vmatpush1.msra.mxu0 0.0
      %351 = vmatprep.subr.mxu0 0.0
      %352 = vmatpush1.msra.mxu0 0.0
      %353 = vmatprep.subr.mxu0 0.0
      %354 = vmatpush1.msra.mxu0 0.0
      %355 = vmatprep.subr.mxu0 0.0
      %356 = vmatpush1.msra.mxu0 0.0
      %357 = vmatprep.subr.mxu0 0.0
      %358 = vmatpush1.msra.mxu0 0.0
      %359 = vmatprep.subr.mxu0 0.0
      %360 = vmatpush1.msra.mxu0 0.0
      %361 = vmatprep.subr.mxu0 0.0
      %362 = vmatpush1.msra.mxu0 0.0
      %363 = vmatprep.subr.mxu0 0.0
      %364 = vmatpush1.msra.mxu0 0.0
      %365 = vmatprep.subr.mxu0 0.0
      %366 = vmatpush1.msra.mxu0 0.0
      %367 = vmatprep.subr.mxu0 0.0
      %368 = vmatpush1.msra.mxu0 0.0
      %369 = vmatprep.subr.mxu0 0.0
      %370 = vmatpush1.msra.mxu0 0.0
      %371 = vmatprep.subr.mxu0 0.0
      %372 = vmatpush1.msra.mxu0 0.0
      %373 = vmatprep.subr.mxu0 0.0
      %374 = vmatpush1.msra.mxu0 0.0
      %375 = vmatprep.subr.mxu0 0.0
      %376 = vmatpush1.msra.mxu0 0.0
      %377 = vmatprep.subr.mxu0 0.0
      %378 = vmatpush1.msra.mxu0 0.0
      %379 = vmatprep.mubr.f32.mxu0 0.0
      %v380 = vand.u32 %v307, 4294901760
      %v381 = vsub.f32 %v307, %v380
      %v382 = vand.u32 %v381, 4294901760
      %v383 = vsub.f32 %v381, %v382
      %v384 = vand.u32 %v383, 4294901760
      %385 = vmatmul.mubr.f32.gmra.mrb[0].mxu0 %v384
      %v386 = vpop.f32.mrb[0].mxu0
      %v387 = vadd.f32 %v303, %v386
      %v388 = vpop.f32.mrb[0].mxu0
      %389 = vdwg.mxu0
      %390 = vmatprep.subr.mxu0 0.0
      %v391 = vand.u32 %v298, 4294901760
      %v392 = vsub.f32 %v298, %v391
      %v393 = vand.u32 %v392, 4294901760
      %v394 = vsub.f32 %v392, %v393
      %v395 = vand.u32 %v394, 4294901760
      %396 = vmatpush1.msra.mxu0 %v395
      %397 = vmatprep.subr.mxu0 0.0
      %v398 = vand.u32 %v311, 4294901760
      %v399 = vsub.f32 %v311, %v398
      %v400 = vand.u32 %v399, 4294901760
      %v401 = vsub.f32 %v399, %v400
      %v402 = vand.u32 %v401, 4294901760
      %403 = vmatpush1.msra.mxu0 %v402
      %404 = vmatprep.subr.mxu0 0.0
      %405 = vmatpush1.msra.mxu0 0.0
      %406 = vmatprep.subr.mxu0 0.0
      %407 = vmatpush1.msra.mxu0 0.0
      %408 = vmatprep.subr.mxu0 0.0
      %409 = vmatpush1.msra.mxu0 0.0
      %410 = vmatprep.subr.mxu0 0.0
      %411 = vmatpush1.msra.mxu0 0.0
      %412 = vmatprep.subr.mxu0 0.0
      %413 = vmatpush1.msra.mxu0 0.0
      %414 = vmatprep.subr.mxu0 0.0
      %415 = vmatpush1.msra.mxu0 0.0
      %416 = vmatprep.subr.mxu0 0.0
      %417 = vmatpush1.msra.mxu0 0.0
      %418 = vmatprep.subr.mxu0 0.0
      %419 = vmatpush1.msra.mxu0 0.0
      %420 = vmatprep.subr.mxu0 0.0
      %421 = vmatpush1.msra.mxu0 0.0
      %422 = vmatprep.subr.mxu0 0.0
      %423 = vmatpush1.msra.mxu0 0.0
      %424 = vmatprep.subr.mxu0 0.0
      %425 = vmatpush1.msra.mxu0 0.0
      %426 = vmatprep.subr.mxu0 0.0
      %427 = vmatpush1.msra.mxu0 0.0
      %428 = vmatprep.subr.mxu0 0.0
      %429 = vmatpush1.msra.mxu0 0.0
      %430 = vmatprep.subr.mxu0 0.0
      %431 = vmatpush1.msra.mxu0 0.0
      %432 = vmatprep.subr.mxu0 0.0
      %433 = vmatpush1.msra.mxu0 0.0
      %434 = vmatprep.subr.mxu0 0.0
      %435 = vmatpush1.msra.mxu0 0.0
      %436 = vmatprep.subr.mxu0 0.0
      %437 = vmatpush1.msra.mxu0 0.0
      %438 = vmatprep.subr.mxu0 0.0
      %439 = vmatpush1.msra.mxu0 0.0
      %440 = vmatprep.subr.mxu0 0.0
      %441 = vmatpush1.msra.mxu0 0.0
      %442 = vmatprep.subr.mxu0 0.0
      %443 = vmatpush1.msra.mxu0 0.0
      %444 = vmatprep.subr.mxu0 0.0
      %445 = vmatpush1.msra.mxu0 0.0
      %446 = vmatprep.subr.mxu0 0.0
      %447 = vmatpush1.msra.mxu0 0.0
      %448 = vmatprep.subr.mxu0 0.0
      %449 = vmatpush1.msra.mxu0 0.0
      %450 = vmatprep.subr.mxu0 0.0
      %451 = vmatpush1.msra.mxu0 0.0
      %452 = vmatprep.subr.mxu0 0.0
      %453 = vmatpush1.msra.mxu0 0.0
      %454 = vmatprep.subr.mxu0 0.0
      %455 = vmatpush1.msra.mxu0 0.0
      %456 = vmatprep.subr.mxu0 0.0
      %457 = vmatpush1.msra.mxu0 0.0
      %458 = vmatprep.subr.mxu0 0.0
      %459 = vmatpush1.msra.mxu0 0.0
      %460 = vmatprep.subr.mxu0 0.0
      %461 = vmatpush1.msra.mxu0 0.0
      %462 = vmatprep.subr.mxu0 0.0
      %463 = vmatpush1.msra.mxu0 0.0
      %464 = vmatprep.mubr.f32.mxu0 0.0
      %v465 = vand.u32 %v307, 4294901760
      %466 = vmatmul.mubr.f32.gmra.mrb[0].mxu0 %v465
      %v467 = vpop.f32.mrb[0].mxu0
      %v468 = vadd.f32 %v387, %v467
      %v469 = vpop.f32.mrb[0].mxu0
      %470 = vdwg.mxu0
      %471 = vmatprep.subr.mxu0 0.0
      %v472 = vand.u32 %v298, 4294901760
      %v473 = vsub.f32 %v298, %v472
      %474 = vmatpush1.msra.mxu0 %v473
      %475 = vmatprep.subr.mxu0 0.0
      %v476 = vand.u32 %v311, 4294901760
      %v477 = vsub.f32 %v311, %v476
      %478 = vmatpush1.msra.mxu0 %v477
      %479 = vmatprep.subr.mxu0 0.0
      %480 = vmatpush1.msra.mxu0 0.0
      %481 = vmatprep.subr.mxu0 0.0
      %482 = vmatpush1.msra.mxu0 0.0
      %483 = vmatprep.subr.mxu0 0.0
      %484 = vmatpush1.msra.mxu0 0.0
      %485 = vmatprep.subr.mxu0 0.0
      %486 = vmatpush1.msra.mxu0 0.0
      %487 = vmatprep.subr.mxu0 0.0
      %488 = vmatpush1.msra.mxu0 0.0
      %489 = vmatprep.subr.mxu0 0.0
      %490 = vmatpush1.msra.mxu0 0.0
      %491 = vmatprep.subr.mxu0 0.0
      %492 = vmatpush1.msra.mxu0 0.0
      %493 = vmatprep.subr.mxu0 0.0
      %494 = vmatpush1.msra.mxu0 0.0
      %495 = vmatprep.subr.mxu0 0.0
      %496 = vmatpush1.msra.mxu0 0.0
      %497 = vmatprep.subr.mxu0 0.0
      %498 = vmatpush1.msra.mxu0 0.0
      %499 = vmatprep.subr.mxu0 0.0
      %500 = vmatpush1.msra.mxu0 0.0
      %501 = vmatprep.subr.mxu0 0.0
      %502 = vmatpush1.msra.mxu0 0.0
      %503 = vmatprep.subr.mxu0 0.0
      %504 = vmatpush1.msra.mxu0 0.0
      %505 = vmatprep.subr.mxu0 0.0
      %506 = vmatpush1.msra.mxu0 0.0
      %507 = vmatprep.subr.mxu0 0.0
      %508 = vmatpush1.msra.mxu0 0.0
      %509 = vmatprep.subr.mxu0 0.0
      %510 = vmatpush1.msra.mxu0 0.0
      %511 = vmatprep.subr.mxu0 0.0
      %512 = vmatpush1.msra.mxu0 0.0
      %513 = vmatprep.subr.mxu0 0.0
      %514 = vmatpush1.msra.mxu0 0.0
      %515 = vmatprep.subr.mxu0 0.0
      %516 = vmatpush1.msra.mxu0 0.0
      %517 = vmatprep.subr.mxu0 0.0
      %518 = vmatpush1.msra.mxu0 0.0
      %519 = vmatprep.subr.mxu0 0.0
      %520 = vmatpush1.msra.mxu0 0.0
      %521 = vmatprep.subr.mxu0 0.0
      %522 = vmatpush1.msra.mxu0 0.0
      %523 = vmatprep.subr.mxu0 0.0
      %524 = vmatpush1.msra.mxu0 0.0
      %525 = vmatprep.subr.mxu0 0.0
      %526 = vmatpush1.msra.mxu0 0.0
      %527 = vmatprep.subr.mxu0 0.0
      %528 = vmatpush1.msra.mxu0 0.0
      %529 = vmatprep.subr.mxu0 0.0
      %530 = vmatpush1.msra.mxu0 0.0
      %531 = vmatprep.subr.mxu0 0.0
      %532 = vmatpush1.msra.mxu0 0.0
      %533 = vmatprep.subr.mxu0 0.0
      %534 = vmatpush1.msra.mxu0 0.0
      %535 = vmatprep.subr.mxu0 0.0
      %536 = vmatpush1.msra.mxu0 0.0
      %537 = vmatprep.subr.mxu0 0.0
      %538 = vmatpush1.msra.mxu0 0.0
      %539 = vmatprep.mubr.f32.mxu0 0.0
      %v540 = vand.u32 %v307, 4294901760
      %v541 = vsub.f32 %v307, %v540
      %542 = vmatmul.mubr.f32.gmra.mrb[0].mxu0 %v541
      %v543 = vpop.f32.mrb[0].mxu0
      %v544 = vadd.f32 %v468, %v543
      %v545 = vpop.f32.mrb[0].mxu0
      %546 = vdwg.mxu0
      %547 = vmatprep.subr.mxu0 0.0
      %v548 = vand.u32 %v298, 4294901760
      %549 = vmatpush1.msra.mxu0 %v548
      %550 = vmatprep.subr.mxu0 0.0
      %v551 = vand.u32 %v311, 4294901760
      %552 = vmatpush1.msra.mxu0 %v551
      %553 = vmatprep.subr.mxu0 0.0
      %554 = vmatpush1.msra.mxu0 0.0
      %555 = vmatprep.subr.mxu0 0.0
      %556 = vmatpush1.msra.mxu0 0.0
      %557 = vmatprep.subr.mxu0 0.0
      %558 = vmatpush1.msra.mxu0 0.0
      %559 = vmatprep.subr.mxu0 0.0
      %560 = vmatpush1.msra.mxu0 0.0
      %561 = vmatprep.subr.mxu0 0.0
      %562 = vmatpush1.msra.mxu0 0.0
      %563 = vmatprep.subr.mxu0 0.0
      %564 = vmatpush1.msra.mxu0 0.0
      %565 = vmatprep.subr.mxu0 0.0
      %566 = vmatpush1.msra.mxu0 0.0
      %567 = vmatprep.subr.mxu0 0.0
      %568 = vmatpush1.msra.mxu0 0.0
      %569 = vmatprep.subr.mxu0 0.0
      %570 = vmatpush1.msra.mxu0 0.0
      %571 = vmatprep.subr.mxu0 0.0
      %572 = vmatpush1.msra.mxu0 0.0
      %573 = vmatprep.subr.mxu0 0.0
      %574 = vmatpush1.msra.mxu0 0.0
      %575 = vmatprep.subr.mxu0 0.0
      %576 = vmatpush1.msra.mxu0 0.0
      %577 = vmatprep.subr.mxu0 0.0
      %578 = vmatpush1.msra.mxu0 0.0
      %579 = vmatprep.subr.mxu0 0.0
      %580 = vmatpush1.msra.mxu0 0.0
      %581 = vmatprep.subr.mxu0 0.0
      %582 = vmatpush1.msra.mxu0 0.0
      %583 = vmatprep.subr.mxu0 0.0
      %584 = vmatpush1.msra.mxu0 0.0
      %585 = vmatprep.subr.mxu0 0.0
      %586 = vmatpush1.msra.mxu0 0.0
      %587 = vmatprep.subr.mxu0 0.0
      %588 = vmatpush1.msra.mxu0 0.0
      %589 = vmatprep.subr.mxu0 0.0
      %590 = vmatpush1.msra.mxu0 0.0
      %591 = vmatprep.subr.mxu0 0.0
      %592 = vmatpush1.msra.mxu0 0.0
      %593 = vmatprep.subr.mxu0 0.0
      %594 = vmatpush1.msra.mxu0 0.0
      %595 = vmatprep.subr.mxu0 0.0
      %596 = vmatpush1.msra.mxu0 0.0
      %597 = vmatprep.subr.mxu0 0.0
      %598 = vmatpush1.msra.mxu0 0.0
      %599 = vmatprep.subr.mxu0 0.0
      %600 = vmatpush1.msra.mxu0 0.0
      %601 = vmatprep.subr.mxu0 0.0
      %602 = vmatpush1.msra.mxu0 0.0
      %603 = vmatprep.subr.mxu0 0.0
      %604 = vmatpush1.msra.mxu0 0.0
      %605 = vmatprep.subr.mxu0 0.0
      %606 = vmatpush1.msra.mxu0 0.0
      %607 = vmatprep.subr.mxu0 0.0
      %608 = vmatpush1.msra.mxu0 0.0
      %609 = vmatprep.subr.mxu0 0.0
      %610 = vmatpush1.msra.mxu0 0.0
      %611 = vmatprep.subr.mxu0 0.0
      %612 = vmatpush1.msra.mxu0 0.0
      %613 = vmatprep.mubr.f32.mxu0 0.0
      %v614 = vand.u32 %v307, 4294901760
      %v615 = vsub.f32 %v307, %v614
      %v616 = vand.u32 %v615, 4294901760
      %617 = vmatmul.mubr.f32.gmra.mrb[0].mxu0 %v616
      %v618 = vpop.f32.mrb[0].mxu0
      %v619 = vadd.f32 %v544, %v618
      %v620 = vpop.f32.mrb[0].mxu0
      %621 = vdwg.mxu0
      %622 = vmatprep.subr.mxu0 0.0
      %v623 = vand.u32 %v298, 4294901760
      %v624 = vsub.f32 %v298, %v623
      %v625 = vand.u32 %v624, 4294901760
      %626 = vmatpush1.msra.mxu0 %v625
      %627 = vmatprep.subr.mxu0 0.0
      %v628 = vand.u32 %v311, 4294901760
      %v629 = vsub.f32 %v311, %v628
      %v630 = vand.u32 %v629, 4294901760
      %631 = vmatpush1.msra.mxu0 %v630
      %632 = vmatprep.subr.mxu0 0.0
      %633 = vmatpush1.msra.mxu0 0.0
      %634 = vmatprep.subr.mxu0 0.0
      %635 = vmatpush1.msra.mxu0 0.0
      %636 = vmatprep.subr.mxu0 0.0
      %637 = vmatpush1.msra.mxu0 0.0
      %638 = vmatprep.subr.mxu0 0.0
      %639 = vmatpush1.msra.mxu0 0.0
      %640 = vmatprep.subr.mxu0 0.0
      %641 = vmatpush1.msra.mxu0 0.0
      %642 = vmatprep.subr.mxu0 0.0
      %643 = vmatpush1.msra.mxu0 0.0
      %644 = vmatprep.subr.mxu0 0.0
      %645 = vmatpush1.msra.mxu0 0.0
      %646 = vmatprep.subr.mxu0 0.0
      %647 = vmatpush1.msra.mxu0 0.0
      %648 = vmatprep.subr.mxu0 0.0
      %649 = vmatpush1.msra.mxu0 0.0
      %650 = vmatprep.subr.mxu0 0.0
      %651 = vmatpush1.msra.mxu0 0.0
      %652 = vmatprep.subr.mxu0 0.0
      %653 = vmatpush1.msra.mxu0 0.0
      %654 = vmatprep.subr.mxu0 0.0
      %655 = vmatpush1.msra.mxu0 0.0
      %656 = vmatprep.subr.mxu0 0.0
      %657 = vmatpush1.msra.mxu0 0.0
      %658 = vmatprep.subr.mxu0 0.0
      %659 = vmatpush1.msra.mxu0 0.0
      %660 = vmatprep.subr.mxu0 0.0
      %661 = vmatpush1.msra.mxu0 0.0
      %662 = vmatprep.subr.mxu0 0.0
      %663 = vmatpush1.msra.mxu0 0.0
      %664 = vmatprep.subr.mxu0 0.0
      %665 = vmatpush1.msra.mxu0 0.0
      %666 = vmatprep.subr.mxu0 0.0
      %667 = vmatpush1.msra.mxu0 0.0
      %668 = vmatprep.subr.mxu0 0.0
      %669 = vmatpush1.msra.mxu0 0.0
      %670 = vmatprep.subr.mxu0 0.0
      %671 = vmatpush1.msra.mxu0 0.0
      %672 = vmatprep.subr.mxu0 0.0
      %673 = vmatpush1.msra.mxu0 0.0
      %674 = vmatprep.subr.mxu0 0.0
      %675 = vmatpush1.msra.mxu0 0.0
      %676 = vmatprep.subr.mxu0 0.0
      %677 = vmatpush1.msra.mxu0 0.0
      %678 = vmatprep.subr.mxu0 0.0
      %679 = vmatpush1.msra.mxu0 0.0
      %680 = vmatprep.subr.mxu0 0.0
      %681 = vmatpush1.msra.mxu0 0.0
      %682 = vmatprep.subr.mxu0 0.0
      %683 = vmatpush1.msra.mxu0 0.0
      %684 = vmatprep.subr.mxu0 0.0
      %685 = vmatpush1.msra.mxu0 0.0
      %686 = vmatprep.subr.mxu0 0.0
      %687 = vmatpush1.msra.mxu0 0.0
      %688 = vmatprep.subr.mxu0 0.0
      %689 = vmatpush1.msra.mxu0 0.0
      %690 = vmatprep.subr.mxu0 0.0
      %691 = vmatpush1.msra.mxu0 0.0
      %692 = vmatprep.mubr.f32.mxu0 0.0
      %v693 = vand.u32 %v307, 4294901760
      %694 = vmatmul.mubr.f32.gmra.mrb[0].mxu0 %v693
      %v695 = vpop.f32.mrb[0].mxu0
      %v696 = vadd.f32 %v619, %v695
      %v697 = vpop.f32.mrb[0].mxu0
      %698 = vdwg.mxu0
      %699 = vmatprep.subr.mxu0 0.0
      %v700 = vand.u32 %v298, 4294901760
      %701 = vmatpush1.msra.mxu0 %v700
      %702 = vmatprep.subr.mxu0 0.0
      %v703 = vand.u32 %v311, 4294901760
      %704 = vmatpush1.msra.mxu0 %v703
      %705 = vmatprep.subr.mxu0 0.0
      %706 = vmatpush1.msra.mxu0 0.0
      %707 = vmatprep.subr.mxu0 0.0
      %708 = vmatpush1.msra.mxu0 0.0
      %709 = vmatprep.subr.mxu0 0.0
      %710 = vmatpush1.msra.mxu0 0.0
      %711 = vmatprep.subr.mxu0 0.0
      %712 = vmatpush1.msra.mxu0 0.0
      %713 = vmatprep.subr.mxu0 0.0
      %714 = vmatpush1.msra.mxu0 0.0
      %715 = vmatprep.subr.mxu0 0.0
      %716 = vmatpush1.msra.mxu0 0.0
      %717 = vmatprep.subr.mxu0 0.0
      %718 = vmatpush1.msra.mxu0 0.0
      %719 = vmatprep.subr.mxu0 0.0
      %720 = vmatpush1.msra.mxu0 0.0
      %721 = vmatprep.subr.mxu0 0.0
      %722 = vmatpush1.msra.mxu0 0.0
      %723 = vmatprep.subr.mxu0 0.0
      %724 = vmatpush1.msra.mxu0 0.0
      %725 = vmatprep.subr.mxu0 0.0
      %726 = vmatpush1.msra.mxu0 0.0
      %727 = vmatprep.subr.mxu0 0.0
      %728 = vmatpush1.msra.mxu0 0.0
      %729 = vmatprep.subr.mxu0 0.0
      %730 = vmatpush1.msra.mxu0 0.0
      %731 = vmatprep.subr.mxu0 0.0
      %732 = vmatpush1.msra.mxu0 0.0
      %733 = vmatprep.subr.mxu0 0.0
      %734 = vmatpush1.msra.mxu0 0.0
      %735 = vmatprep.subr.mxu0 0.0
      %736 = vmatpush1.msra.mxu0 0.0
      %737 = vmatprep.subr.mxu0 0.0
      %738 = vmatpush1.msra.mxu0 0.0
      %739 = vmatprep.subr.mxu0 0.0
      %740 = vmatpush1.msra.mxu0 0.0
      %741 = vmatprep.subr.mxu0 0.0
      %742 = vmatpush1.msra.mxu0 0.0
      %743 = vmatprep.subr.mxu0 0.0
      %744 = vmatpush1.msra.mxu0 0.0
      %745 = vmatprep.subr.mxu0 0.0
      %746 = vmatpush1.msra.mxu0 0.0
      %747 = vmatprep.subr.mxu0 0.0
      %748 = vmatpush1.msra.mxu0 0.0
      %749 = vmatprep.subr.mxu0 0.0
      %750 = vmatpush1.msra.mxu0 0.0
      %751 = vmatprep.subr.mxu0 0.0
      %752 = vmatpush1.msra.mxu0 0.0
      %753 = vmatprep.subr.mxu0 0.0
      %754 = vmatpush1.msra.mxu0 0.0
      %755 = vmatprep.subr.mxu0 0.0
      %756 = vmatpush1.msra.mxu0 0.0
      %757 = vmatprep.subr.mxu0 0.0
      %758 = vmatpush1.msra.mxu0 0.0
      %759 = vmatprep.subr.mxu0 0.0
      %760 = vmatpush1.msra.mxu0 0.0
      %761 = vmatprep.subr.mxu0 0.0
      %762 = vmatpush1.msra.mxu0 0.0
      %763 = vmatprep.subr.mxu0 0.0
      %764 = vmatpush1.msra.mxu0 0.0
      %765 = vmatprep.mubr.f32.mxu0 0.0
      %v766 = vand.u32 %v307, 4294901760
      %767 = vmatmul.mubr.f32.gmra.mrb[0].mxu0 %v766
      %v768 = vpop.f32.mrb[0].mxu0
      %v769 = vadd.f32 %v696, %v768
      %v770 = vpop.f32.mrb[0].mxu0
      %771 = vdwg.mxu0
      %v772 = vxor.u32 %v769, 2147483648
      %v773 = vmul.f32 %v772, 1.442695
      %v774 = vpow.pop %v773
      %v775 = vadd.f32 %v774, 1.0
      %v776 = vrcp.pop %v775
      %v777 = vmul.f32 1.0, %v776
      %v778 = vmul.f32 %v769, %v777
      %780 = vrot.lane.b32.xlu0 %v778, 9
      %v781 = vpop.permute.xlu0 %780
      %v783 = vsel %vm305, 0.0, %v781
      %v784 = vld [vmem:[%s2] sm:$0x1]
      %v786 = vlaneseq
      %v787 = vshrl.u32 %v786, 7
      %v788 = vsub.s32 0, %v787
      %v789 = vrot.slane %v784, %v788
      %v791 = vmul.f32 %v783, %v789
      %792 = vrot.lane.b32.xlu0 %v778, 8
      %v793 = vpop.permute.xlu0 %792
      %vm795 = vcmask 64512
      %v796 = vsel %vm795, 0.0, %v793
      %s797 = scalar_lea.vmem %s2, 1
      %v798 = vld [vmem:[%s797] sm:$0x1]
      %v800 = vlaneseq
      %v801 = vshrl.u32 %v800, 7
      %v802 = vsub.s32 0, %v801
      %v803 = vrot.slane %v798, %v802
      %v805 = vmul.f32 %v796, %v803
      %806 = vrot.lane.b32.xlu0 %v778, 7
      %v807 = vpop.permute.xlu0 %806
      %vm809 = vcmask 56320
      %v810 = vsel %vm809, 0.0, %v807
      %s811 = scalar_lea.vmem %s2, 2
      %v812 = vld [vmem:[%s811] sm:$0x1]
      %v814 = vlaneseq
      %v815 = vshrl.u32 %v814, 7
      %v816 = vsub.s32 0, %v815
      %v817 = vrot.slane %v812, %v816
      %v819 = vmul.f32 %v810, %v817
      %820 = vrot.lane.b32.xlu0 %v778, 1
      %v821 = vpop.permute.xlu0 %820
      %vm823 = vcmask 7168
      %v824 = vsel %vm823, 0.0, %v821
      %s825 = scalar_lea.vmem %s2, 3
      %v826 = vld [vmem:[%s825] sm:$0x1]
      %v828 = vlaneseq
      %v829 = vshrl.u32 %v828, 7
      %v830 = vsub.s32 0, %v829
      %v831 = vrot.slane %v826, %v830
      %v833 = vmul.f32 %v824, %v831
      %834 = vrot.lane.b32.xlu0 %v778, 127
      %v835 = vpop.permute.xlu0 %834
      %vm837 = vcmask 515072
      %v838 = vsel %vm837, %v835, 0.0
      %s839 = scalar_lea.vmem %s2, 5
      %v840 = vld [vmem:[%s839] sm:$0x1]
      %v842 = vlaneseq
      %v843 = vshrl.u32 %v842, 7
      %v844 = vsub.s32 0, %v843
      %v845 = vrot.slane %v840, %v844
      %v847 = vmul.f32 %v838, %v845
      %848 = vrot.lane.b32.xlu0 %v778, 121
      %v849 = vpop.permute.xlu0 %848
      %vm851 = vcmask 465920
      %v852 = vsel %vm851, %v849, 0.0
      %s853 = scalar_lea.vmem %s2, 6
      %v854 = vld [vmem:[%s853] sm:$0x1]
      %v856 = vlaneseq
      %v857 = vshrl.u32 %v856, 7
      %v858 = vsub.s32 0, %v857
      %v859 = vrot.slane %v854, %v858
      %v861 = vmul.f32 %v852, %v859
      %862 = vrot.lane.b32.xlu0 %v778, 120
      %v863 = vpop.permute.xlu0 %862
      %vm865 = vcmask 457728
      %v866 = vsel %vm865, %v863, 0.0
      %s867 = scalar_lea.vmem %s2, 7
      %v868 = vld [vmem:[%s867] sm:$0x1]
      %v870 = vlaneseq
      %v871 = vshrl.u32 %v870, 7
      %v872 = vsub.s32 0, %v871
      %v873 = vrot.slane %v868, %v872
      %v875 = vmul.f32 %v866, %v873
      %876 = vrot.lane.b32.xlu0 %v778, 119
      %v877 = vpop.permute.xlu0 %876
      %vm879 = vcmask 449536
      %v880 = vsel %vm879, %v877, 0.0
      %s881 = scalar_lea.vmem %s2, 8
      %v882 = vld [vmem:[%s881] sm:$0x1]
      %v884 = vlaneseq
      %v885 = vshrl.u32 %v884, 7
      %v886 = vsub.s32 0, %v885
      %v887 = vrot.slane %v882, %v886
      %v889 = vmul.f32 %v880, %v887
      %891 = vset.pattern.permute.xlu0 0
      %892 = vperm.xlu0 %891, %v297
      %v893 = vpop.permute.xlu0 %892
      %vm895 = vcmask 588800
      %v897 = vsel %vm895, %v296, 0
      %899 = vmatprep.subr.mxu0 0.0
      %v900 = vand.u32 %v791, 4294901760
      %901 = vmatpush1.msra.mxu0 %v900
      %902 = vmatprep.subr.mxu0 0.0
      %v903 = vand.u32 %v805, 4294901760
      %904 = vmatpush1.msra.mxu0 %v903
      %905 = vmatprep.subr.mxu0 0.0
      %v906 = vand.u32 %v819, 4294901760
      %907 = vmatpush1.msra.mxu0 %v906
      %908 = vmatprep.subr.mxu0 0.0
      %v909 = vand.u32 %v833, 4294901760
      %910 = vmatpush1.msra.mxu0 %v909
      %911 = vmatprep.subr.mxu0 0.0
      %v912 = vand.u32 %v778, 4294901760
      %913 = vmatpush1.msra.mxu0 %v912
      %914 = vmatprep.subr.mxu0 0.0
      %v915 = vand.u32 %v847, 4294901760
      %916 = vmatpush1.msra.mxu0 %v915
      %917 = vmatprep.subr.mxu0 0.0
      %v918 = vand.u32 %v861, 4294901760
      %919 = vmatpush1.msra.mxu0 %v918
      %920 = vmatprep.subr.mxu0 0.0
      %v921 = vand.u32 %v875, 4294901760
      %922 = vmatpush1.msra.mxu0 %v921
      %923 = vmatprep.subr.mxu0 0.0
      %v924 = vand.u32 %v889, 4294901760
      %925 = vmatpush1.msra.mxu0 %v924
      %926 = vmatprep.subr.mxu0 0.0
      %927 = vmatpush1.msra.mxu0 0.0
      %928 = vmatprep.subr.mxu0 0.0
      %929 = vmatpush1.msra.mxu0 0.0
      %930 = vmatprep.subr.mxu0 0.0
      %931 = vmatpush1.msra.mxu0 0.0
      %932 = vmatprep.subr.mxu0 0.0
      %933 = vmatpush1.msra.mxu0 0.0
      %934 = vmatprep.subr.mxu0 0.0
      %935 = vmatpush1.msra.mxu0 0.0
      %936 = vmatprep.subr.mxu0 0.0
      %937 = vmatpush1.msra.mxu0 0.0
      %938 = vmatprep.subr.mxu0 0.0
      %939 = vmatpush1.msra.mxu0 0.0
      %940 = vmatprep.subr.mxu0 0.0
      %941 = vmatpush1.msra.mxu0 0.0
      %942 = vmatprep.subr.mxu0 0.0
      %943 = vmatpush1.msra.mxu0 0.0
      %944 = vmatprep.subr.mxu0 0.0
      %945 = vmatpush1.msra.mxu0 0.0
      %946 = vmatprep.subr.mxu0 0.0
      %947 = vmatpush1.msra.mxu0 0.0
      %948 = vmatprep.subr.mxu0 0.0
      %949 = vmatpush1.msra.mxu0 0.0
      %950 = vmatprep.subr.mxu0 0.0
      %951 = vmatpush1.msra.mxu0 0.0
      %952 = vmatprep.subr.mxu0 0.0
      %953 = vmatpush1.msra.mxu0 0.0
      %954 = vmatprep.subr.mxu0 0.0
      %955 = vmatpush1.msra.mxu0 0.0
      %956 = vmatprep.subr.mxu0 0.0
      %957 = vmatpush1.msra.mxu0 0.0
      %958 = vmatprep.subr.mxu0 0.0
      %959 = vmatpush1.msra.mxu0 0.0
      %960 = vmatprep.subr.mxu0 0.0
      %961 = vmatpush1.msra.mxu0 0.0
      %962 = vmatprep.subr.mxu0 0.0
      %963 = vmatpush1.msra.mxu0 0.0
      %964 = vmatprep.subr.mxu0 0.0
      %965 = vmatpush1.msra.mxu0 0.0
      %966 = vmatprep.subr.mxu0 0.0
      %967 = vmatpush1.msra.mxu0 0.0
      %968 = vmatprep.subr.mxu0 0.0
      %969 = vmatpush1.msra.mxu0 0.0
      %970 = vmatprep.subr.mxu0 0.0
      %971 = vmatpush1.msra.mxu0 0.0
      %972 = vmatprep.mubr.f32.mxu0 0.0
      %v973 = vand.u32 %v897, 4294901760
      %v974 = vsub.f32 %v897, %v973
      %v975 = vand.u32 %v974, 4294901760
      %v976 = vsub.f32 %v974, %v975
      %v977 = vand.u32 %v976, 4294901760
      %978 = vmatmul.mubr.f32.gmra.mrb[0].mxu0 %v977
      %v979 = vpop.f32.mrb[0].mxu0
      %v980 = vadd.f32 %v893, %v979
      %v981 = vpop.f32.mrb[0].mxu0
      %982 = vdwg.mxu0
      %983 = vmatprep.subr.mxu0 0.0
      %v984 = vand.u32 %v791, 4294901760
      %v985 = vsub.f32 %v791, %v984
      %v986 = vand.u32 %v985, 4294901760
      %v987 = vsub.f32 %v985, %v986
      %v988 = vand.u32 %v987, 4294901760
      %989 = vmatpush1.msra.mxu0 %v988
      %990 = vmatprep.subr.mxu0 0.0
      %v991 = vand.u32 %v805, 4294901760
      %v992 = vsub.f32 %v805, %v991
      %v993 = vand.u32 %v992, 4294901760
      %v994 = vsub.f32 %v992, %v993
      %v995 = vand.u32 %v994, 4294901760
      %996 = vmatpush1.msra.mxu0 %v995
      %997 = vmatprep.subr.mxu0 0.0
      %v998 = vand.u32 %v819, 4294901760
      %v999 = vsub.f32 %v819, %v998
      %v1000 = vand.u32 %v999, 4294901760
      %v1001 = vsub.f32 %v999, %v1000
      %v1002 = vand.u32 %v1001, 4294901760
      %1003 = vmatpush1.msra.mxu0 %v1002
      %1004 = vmatprep.subr.mxu0 0.0
      %v1005 = vand.u32 %v833, 4294901760
      %v1006 = vsub.f32 %v833, %v1005
      %v1007 = vand.u32 %v1006, 4294901760
      %v1008 = vsub.f32 %v1006, %v1007
      %v1009 = vand.u32 %v1008, 4294901760
      %1010 = vmatpush1.msra.mxu0 %v1009
      %1011 = vmatprep.subr.mxu0 0.0
      %v1012 = vand.u32 %v778, 4294901760
      %v1013 = vsub.f32 %v778, %v1012
      %v1014 = vand.u32 %v1013, 4294901760
      %v1015 = vsub.f32 %v1013, %v1014
      %v1016 = vand.u32 %v1015, 4294901760
      %1017 = vmatpush1.msra.mxu0 %v1016
      %1018 = vmatprep.subr.mxu0 0.0
      %v1019 = vand.u32 %v847, 4294901760
      %v1020 = vsub.f32 %v847, %v1019
      %v1021 = vand.u32 %v1020, 4294901760
      %v1022 = vsub.f32 %v1020, %v1021
      %v1023 = vand.u32 %v1022, 4294901760
      %1024 = vmatpush1.msra.mxu0 %v1023
      %1025 = vmatprep.subr.mxu0 0.0
      %v1026 = vand.u32 %v861, 4294901760
      %v1027 = vsub.f32 %v861, %v1026
      %v1028 = vand.u32 %v1027, 4294901760
      %v1029 = vsub.f32 %v1027, %v1028
      %v1030 = vand.u32 %v1029, 4294901760
      %1031 = vmatpush1.msra.mxu0 %v1030
      %1032 = vmatprep.subr.mxu0 0.0
      %v1033 = vand.u32 %v875, 4294901760
      %v1034 = vsub.f32 %v875, %v1033
      %v1035 = vand.u32 %v1034, 4294901760
      %v1036 = vsub.f32 %v1034, %v1035
      %v1037 = vand.u32 %v1036, 4294901760
      %1038 = vmatpush1.msra.mxu0 %v1037
      %1039 = vmatprep.subr.mxu0 0.0
      %v1040 = vand.u32 %v889, 4294901760
      %v1041 = vsub.f32 %v889, %v1040
      %v1042 = vand.u32 %v1041, 4294901760
      %v1043 = vsub.f32 %v1041, %v1042
      %v1044 = vand.u32 %v1043, 4294901760
      %1045 = vmatpush1.msra.mxu0 %v1044
      %1046 = vmatprep.subr.mxu0 0.0
      %1047 = vmatpush1.msra.mxu0 0.0
      %1048 = vmatprep.subr.mxu0 0.0
      %1049 = vmatpush1.msra.mxu0 0.0
      %1050 = vmatprep.subr.mxu0 0.0
      %1051 = vmatpush1.msra.mxu0 0.0
      %1052 = vmatprep.subr.mxu0 0.0
      %1053 = vmatpush1.msra.mxu0 0.0
      %1054 = vmatprep.subr.mxu0 0.0
      %1055 = vmatpush1.msra.mxu0 0.0
      %1056 = vmatprep.subr.mxu0 0.0
      %1057 = vmatpush1.msra.mxu0 0.0
      %1058 = vmatprep.subr.mxu0 0.0
      %1059 = vmatpush1.msra.mxu0 0.0
      %1060 = vmatprep.subr.mxu0 0.0
      %1061 = vmatpush1.msra.mxu0 0.0
      %1062 = vmatprep.subr.mxu0 0.0
      %1063 = vmatpush1.msra.mxu0 0.0
      %1064 = vmatprep.subr.mxu0 0.0
      %1065 = vmatpush1.msra.mxu0 0.0
      %1066 = vmatprep.subr.mxu0 0.0
      %1067 = vmatpush1.msra.mxu0 0.0
      %1068 = vmatprep.subr.mxu0 0.0
      %1069 = vmatpush1.msra.mxu0 0.0
      %1070 = vmatprep.subr.mxu0 0.0
      %1071 = vmatpush1.msra.mxu0 0.0
      %1072 = vmatprep.subr.mxu0 0.0
      %1073 = vmatpush1.msra.mxu0 0.0
      %1074 = vmatprep.subr.mxu0 0.0
      %1075 = vmatpush1.msra.mxu0 0.0
      %1076 = vmatprep.subr.mxu0 0.0
      %1077 = vmatpush1.msra.mxu0 0.0
      %1078 = vmatprep.subr.mxu0 0.0
      %1079 = vmatpush1.msra.mxu0 0.0
      %1080 = vmatprep.subr.mxu0 0.0
      %1081 = vmatpush1.msra.mxu0 0.0
      %1082 = vmatprep.subr.mxu0 0.0
      %1083 = vmatpush1.msra.mxu0 0.0
      %1084 = vmatprep.subr.mxu0 0.0
      %1085 = vmatpush1.msra.mxu0 0.0
      %1086 = vmatprep.subr.mxu0 0.0
      %1087 = vmatpush1.msra.mxu0 0.0
      %1088 = vmatprep.subr.mxu0 0.0
      %1089 = vmatpush1.msra.mxu0 0.0
      %1090 = vmatprep.subr.mxu0 0.0
      %1091 = vmatpush1.msra.mxu0 0.0
      %1092 = vmatprep.mubr.f32.mxu0 0.0
      %v1093 = vand.u32 %v897, 4294901760
      %1094 = vmatmul.mubr.f32.gmra.mrb[0].mxu0 %v1093
      %v1095 = vpop.f32.mrb[0].mxu0
      %v1096 = vadd.f32 %v980, %v1095
      %v1097 = vpop.f32.mrb[0].mxu0
      %1098 = vdwg.mxu0
      %1099 = vmatprep.subr.mxu0 0.0
      %v1100 = vand.u32 %v791, 4294901760
      %v1101 = vsub.f32 %v791, %v1100
      %1102 = vmatpush1.msra.mxu0 %v1101
      %1103 = vmatprep.subr.mxu0 0.0
      %v1104 = vand.u32 %v805, 4294901760
      %v1105 = vsub.f32 %v805, %v1104
      %1106 = vmatpush1.msra.mxu0 %v1105
      %1107 = vmatprep.subr.mxu0 0.0
      %v1108 = vand.u32 %v819, 4294901760
      %v1109 = vsub.f32 %v819, %v1108
      %1110 = vmatpush1.msra.mxu0 %v1109
      %1111 = vmatprep.subr.mxu0 0.0
      %v1112 = vand.u32 %v833, 4294901760
      %v1113 = vsub.f32 %v833, %v1112
      %1114 = vmatpush1.msra.mxu0 %v1113
      %1115 = vmatprep.subr.mxu0 0.0
      %v1116 = vand.u32 %v778, 4294901760
      %v1117 = vsub.f32 %v778, %v1116
      %1118 = vmatpush1.msra.mxu0 %v1117
      %1119 = vmatprep.subr.mxu0 0.0
      %v1120 = vand.u32 %v847, 4294901760
      %v1121 = vsub.f32 %v847, %v1120
      %1122 = vmatpush1.msra.mxu0 %v1121
      %1123 = vmatprep.subr.mxu0 0.0
      %v1124 = vand.u32 %v861, 4294901760
      %v1125 = vsub.f32 %v861, %v1124
      %1126 = vmatpush1.msra.mxu0 %v1125
      %1127 = vmatprep.subr.mxu0 0.0
      %v1128 = vand.u32 %v875, 4294901760
      %v1129 = vsub.f32 %v875, %v1128
      %1130 = vmatpush1.msra.mxu0 %v1129
      %1131 = vmatprep.subr.mxu0 0.0
      %v1132 = vand.u32 %v889, 4294901760
      %v1133 = vsub.f32 %v889, %v1132
      %1134 = vmatpush1.msra.mxu0 %v1133
      %1135 = vmatprep.subr.mxu0 0.0
      %1136 = vmatpush1.msra.mxu0 0.0
      %1137 = vmatprep.subr.mxu0 0.0
      %1138 = vmatpush1.msra.mxu0 0.0
      %1139 = vmatprep.subr.mxu0 0.0
      %1140 = vmatpush1.msra.mxu0 0.0
      %1141 = vmatprep.subr.mxu0 0.0
      %1142 = vmatpush1.msra.mxu0 0.0
      %1143 = vmatprep.subr.mxu0 0.0
      %1144 = vmatpush1.msra.mxu0 0.0
      %1145 = vmatprep.subr.mxu0 0.0
      %1146 = vmatpush1.msra.mxu0 0.0
      %1147 = vmatprep.subr.mxu0 0.0
      %1148 = vmatpush1.msra.mxu0 0.0
      %1149 = vmatprep.subr.mxu0 0.0
      %1150 = vmatpush1.msra.mxu0 0.0
      %1151 = vmatprep.subr.mxu0 0.0
      %1152 = vmatpush1.msra.mxu0 0.0
      %1153 = vmatprep.subr.mxu0 0.0
      %1154 = vmatpush1.msra.mxu0 0.0
      %1155 = vmatprep.subr.mxu0 0.0
      %1156 = vmatpush1.msra.mxu0 0.0
      %1157 = vmatprep.subr.mxu0 0.0
      %1158 = vmatpush1.msra.mxu0 0.0
      %1159 = vmatprep.subr.mxu0 0.0
      %1160 = vmatpush1.msra.mxu0 0.0
      %1161 = vmatprep.subr.mxu0 0.0
      %1162 = vmatpush1.msra.mxu0 0.0
      %1163 = vmatprep.subr.mxu0 0.0
      %1164 = vmatpush1.msra.mxu0 0.0
      %1165 = vmatprep.subr.mxu0 0.0
      %1166 = vmatpush1.msra.mxu0 0.0
      %1167 = vmatprep.subr.mxu0 0.0
      %1168 = vmatpush1.msra.mxu0 0.0
      %1169 = vmatprep.subr.mxu0 0.0
      %1170 = vmatpush1.msra.mxu0 0.0
      %1171 = vmatprep.subr.mxu0 0.0
      %1172 = vmatpush1.msra.mxu0 0.0
      %1173 = vmatprep.subr.mxu0 0.0
      %1174 = vmatpush1.msra.mxu0 0.0
      %1175 = vmatprep.subr.mxu0 0.0
      %1176 = vmatpush1.msra.mxu0 0.0
      %1177 = vmatprep.subr.mxu0 0.0
      %1178 = vmatpush1.msra.mxu0 0.0
      %1179 = vmatprep.subr.mxu0 0.0
      %1180 = vmatpush1.msra.mxu0 0.0
      %1181 = vmatprep.mubr.f32.mxu0 0.0
      %v1182 = vand.u32 %v897, 4294901760
      %v1183 = vsub.f32 %v897, %v1182
      %1184 = vmatmul.mubr.f32.gmra.mrb[0].mxu0 %v1183
      %v1185 = vpop.f32.mrb[0].mxu0
      %v1186 = vadd.f32 %v1096, %v1185
      %v1187 = vpop.f32.mrb[0].mxu0
      %1188 = vdwg.mxu0
      %1189 = vmatprep.subr.mxu0 0.0
      %v1190 = vand.u32 %v791, 4294901760
      %1191 = vmatpush1.msra.mxu0 %v1190
      %1192 = vmatprep.subr.mxu0 0.0
      %v1193 = vand.u32 %v805, 4294901760
      %1194 = vmatpush1.msra.mxu0 %v1193
      %1195 = vmatprep.subr.mxu0 0.0
      %v1196 = vand.u32 %v819, 4294901760
      %1197 = vmatpush1.msra.mxu0 %v1196
      %1198 = vmatprep.subr.mxu0 0.0
      %v1199 = vand.u32 %v833, 4294901760
      %1200 = vmatpush1.msra.mxu0 %v1199
      %1201 = vmatprep.subr.mxu0 0.0
      %v1202 = vand.u32 %v778, 4294901760
      %1203 = vmatpush1.msra.mxu0 %v1202
      %1204 = vmatprep.subr.mxu0 0.0
      %v1205 = vand.u32 %v847, 4294901760
      %1206 = vmatpush1.msra.mxu0 %v1205
      %1207 = vmatprep.subr.mxu0 0.0
      %v1208 = vand.u32 %v861, 4294901760
      %1209 = vmatpush1.msra.mxu0 %v1208
      %1210 = vmatprep.subr.mxu0 0.0
      %v1211 = vand.u32 %v875, 4294901760
      %1212 = vmatpush1.msra.mxu0 %v1211
      %1213 = vmatprep.subr.mxu0 0.0
      %v1214 = vand.u32 %v889, 4294901760
      %1215 = vmatpush1.msra.mxu0 %v1214
      %1216 = vmatprep.subr.mxu0 0.0
      %1217 = vmatpush1.msra.mxu0 0.0
      %1218 = vmatprep.subr.mxu0 0.0
      %1219 = vmatpush1.msra.mxu0 0.0
      %1220 = vmatprep.subr.mxu0 0.0
      %1221 = vmatpush1.msra.mxu0 0.0
      %1222 = vmatprep.subr.mxu0 0.0
      %1223 = vmatpush1.msra.mxu0 0.0
      %1224 = vmatprep.subr.mxu0 0.0
      %1225 = vmatpush1.msra.mxu0 0.0
      %1226 = vmatprep.subr.mxu0 0.0
      %1227 = vmatpush1.msra.mxu0 0.0
      %1228 = vmatprep.subr.mxu0 0.0
      %1229 = vmatpush1.msra.mxu0 0.0
      %1230 = vmatprep.subr.mxu0 0.0
      %1231 = vmatpush1.msra.mxu0 0.0
      %1232 = vmatprep.subr.mxu0 0.0
      %1233 = vmatpush1.msra.mxu0 0.0
      %1234 = vmatprep.subr.mxu0 0.0
      %1235 = vmatpush1.msra.mxu0 0.0
      %1236 = vmatprep.subr.mxu0 0.0
      %1237 = vmatpush1.msra.mxu0 0.0
      %1238 = vmatprep.subr.mxu0 0.0
      %1239 = vmatpush1.msra.mxu0 0.0
      %1240 = vmatprep.subr.mxu0 0.0
      %1241 = vmatpush1.msra.mxu0 0.0
      %1242 = vmatprep.subr.mxu0 0.0
      %1243 = vmatpush1.msra.mxu0 0.0
      %1244 = vmatprep.subr.mxu0 0.0
      %1245 = vmatpush1.msra.mxu0 0.0
      %1246 = vmatprep.subr.mxu0 0.0
      %1247 = vmatpush1.msra.mxu0 0.0
      %1248 = vmatprep.subr.mxu0 0.0
      %1249 = vmatpush1.msra.mxu0 0.0
      %1250 = vmatprep.subr.mxu0 0.0
      %1251 = vmatpush1.msra.mxu0 0.0
      %1252 = vmatprep.subr.mxu0 0.0
      %1253 = vmatpush1.msra.mxu0 0.0
      %1254 = vmatprep.subr.mxu0 0.0
      %1255 = vmatpush1.msra.mxu0 0.0
      %1256 = vmatprep.subr.mxu0 0.0
      %1257 = vmatpush1.msra.mxu0 0.0
      %1258 = vmatprep.subr.mxu0 0.0
      %1259 = vmatpush1.msra.mxu0 0.0
      %1260 = vmatprep.subr.mxu0 0.0
      %1261 = vmatpush1.msra.mxu0 0.0
      %1262 = vmatprep.mubr.f32.mxu0 0.0
      %v1263 = vand.u32 %v897, 4294901760
      %v1264 = vsub.f32 %v897, %v1263
      %v1265 = vand.u32 %v1264, 4294901760
      %1266 = vmatmul.mubr.f32.gmra.mrb[0].mxu0 %v1265
      %v1267 = vpop.f32.mrb[0].mxu0
      %v1268 = vadd.f32 %v1186, %v1267
      %v1269 = vpop.f32.mrb[0].mxu0
      %1270 = vdwg.mxu0
      %1271 = vmatprep.subr.mxu0 0.0
      %v1272 = vand.u32 %v791, 4294901760
      %v1273 = vsub.f32 %v791, %v1272
      %v1274 = vand.u32 %v1273, 4294901760
      %1275 = vmatpush1.msra.mxu0 %v1274
      %1276 = vmatprep.subr.mxu0 0.0
      %v1277 = vand.u32 %v805, 4294901760
      %v1278 = vsub.f32 %v805, %v1277
      %v1279 = vand.u32 %v1278, 4294901760
      %1280 = vmatpush1.msra.mxu0 %v1279
      %1281 = vmatprep.subr.mxu0 0.0
      %v1282 = vand.u32 %v819, 4294901760
      %v1283 = vsub.f32 %v819, %v1282
      %v1284 = vand.u32 %v1283, 4294901760
      %1285 = vmatpush1.msra.mxu0 %v1284
      %1286 = vmatprep.subr.mxu0 0.0
      %v1287 = vand.u32 %v833, 4294901760
      %v1288 = vsub.f32 %v833, %v1287
      %v1289 = vand.u32 %v1288, 4294901760
      %1290 = vmatpush1.msra.mxu0 %v1289
      %1291 = vmatprep.subr.mxu0 0.0
      %v1292 = vand.u32 %v778, 4294901760
      %v1293 = vsub.f32 %v778, %v1292
      %v1294 = vand.u32 %v1293, 4294901760
      %1295 = vmatpush1.msra.mxu0 %v1294
      %1296 = vmatprep.subr.mxu0 0.0
      %v1297 = vand.u32 %v847, 4294901760
      %v1298 = vsub.f32 %v847, %v1297
      %v1299 = vand.u32 %v1298, 4294901760
      %1300 = vmatpush1.msra.mxu0 %v1299
      %1301 = vmatprep.subr.mxu0 0.0
      %v1302 = vand.u32 %v861, 4294901760
      %v1303 = vsub.f32 %v861, %v1302
      %v1304 = vand.u32 %v1303, 4294901760
      %1305 = vmatpush1.msra.mxu0 %v1304
      %1306 = vmatprep.subr.mxu0 0.0
      %v1307 = vand.u32 %v875, 4294901760
      %v1308 = vsub.f32 %v875, %v1307
      %v1309 = vand.u32 %v1308, 4294901760
      %1310 = vmatpush1.msra.mxu0 %v1309
      %1311 = vmatprep.subr.mxu0 0.0
      %v1312 = vand.u32 %v889, 4294901760
      %v1313 = vsub.f32 %v889, %v1312
      %v1314 = vand.u32 %v1313, 4294901760
      %1315 = vmatpush1.msra.mxu0 %v1314
      %1316 = vmatprep.subr.mxu0 0.0
      %1317 = vmatpush1.msra.mxu0 0.0
      %1318 = vmatprep.subr.mxu0 0.0
      %1319 = vmatpush1.msra.mxu0 0.0
      %1320 = vmatprep.subr.mxu0 0.0
      %1321 = vmatpush1.msra.mxu0 0.0
      %1322 = vmatprep.subr.mxu0 0.0
      %1323 = vmatpush1.msra.mxu0 0.0
      %1324 = vmatprep.subr.mxu0 0.0
      %1325 = vmatpush1.msra.mxu0 0.0
      %1326 = vmatprep.subr.mxu0 0.0
      %1327 = vmatpush1.msra.mxu0 0.0
      %1328 = vmatprep.subr.mxu0 0.0
      %1329 = vmatpush1.msra.mxu0 0.0
      %1330 = vmatprep.subr.mxu0 0.0
      %1331 = vmatpush1.msra.mxu0 0.0
      %1332 = vmatprep.subr.mxu0 0.0
      %1333 = vmatpush1.msra.mxu0 0.0
      %1334 = vmatprep.subr.mxu0 0.0
      %1335 = vmatpush1.msra.mxu0 0.0
      %1336 = vmatprep.subr.mxu0 0.0
      %1337 = vmatpush1.msra.mxu0 0.0
      %1338 = vmatprep.subr.mxu0 0.0
      %1339 = vmatpush1.msra.mxu0 0.0
      %1340 = vmatprep.subr.mxu0 0.0
      %1341 = vmatpush1.msra.mxu0 0.0
      %1342 = vmatprep.subr.mxu0 0.0
      %1343 = vmatpush1.msra.mxu0 0.0
      %1344 = vmatprep.subr.mxu0 0.0
      %1345 = vmatpush1.msra.mxu0 0.0
      %1346 = vmatprep.subr.mxu0 0.0
      %1347 = vmatpush1.msra.mxu0 0.0
      %1348 = vmatprep.subr.mxu0 0.0
      %1349 = vmatpush1.msra.mxu0 0.0
      %1350 = vmatprep.subr.mxu0 0.0
      %1351 = vmatpush1.msra.mxu0 0.0
      %1352 = vmatprep.subr.mxu0 0.0
      %1353 = vmatpush1.msra.mxu0 0.0
      %1354 = vmatprep.subr.mxu0 0.0
      %1355 = vmatpush1.msra.mxu0 0.0
      %1356 = vmatprep.subr.mxu0 0.0
      %1357 = vmatpush1.msra.mxu0 0.0
      %1358 = vmatprep.subr.mxu0 0.0
      %1359 = vmatpush1.msra.mxu0 0.0
      %1360 = vmatprep.subr.mxu0 0.0
      %1361 = vmatpush1.msra.mxu0 0.0
      %1362 = vmatprep.mubr.f32.mxu0 0.0
      %v1363 = vand.u32 %v897, 4294901760
      %1364 = vmatmul.mubr.f32.gmra.mrb[0].mxu0 %v1363
      %v1365 = vpop.f32.mrb[0].mxu0
      %v1366 = vadd.f32 %v1268, %v1365
      %v1367 = vpop.f32.mrb[0].mxu0
      %1368 = vdwg.mxu0
      %1369 = vmatprep.subr.mxu0 0.0
      %v1370 = vand.u32 %v791, 4294901760
      %1371 = vmatpush1.msra.mxu0 %v1370
      %1372 = vmatprep.subr.mxu0 0.0
      %v1373 = vand.u32 %v805, 4294901760
      %1374 = vmatpush1.msra.mxu0 %v1373
      %1375 = vmatprep.subr.mxu0 0.0
      %v1376 = vand.u32 %v819, 4294901760
      %1377 = vmatpush1.msra.mxu0 %v1376
      %1378 = vmatprep.subr.mxu0 0.0
      %v1379 = vand.u32 %v833, 4294901760
      %1380 = vmatpush1.msra.mxu0 %v1379
      %1381 = vmatprep.subr.mxu0 0.0
      %v1382 = vand.u32 %v778, 4294901760
      %1383 = vmatpush1.msra.mxu0 %v1382
      %1384 = vmatprep.subr.mxu0 0.0
      %v1385 = vand.u32 %v847, 4294901760
      %1386 = vmatpush1.msra.mxu0 %v1385
      %1387 = vmatprep.subr.mxu0 0.0
      %v1388 = vand.u32 %v861, 4294901760
      %1389 = vmatpush1.msra.mxu0 %v1388
      %1390 = vmatprep.subr.mxu0 0.0
      %v1391 = vand.u32 %v875, 4294901760
      %1392 = vmatpush1.msra.mxu0 %v1391
      %1393 = vmatprep.subr.mxu0 0.0
      %v1394 = vand.u32 %v889, 4294901760
      %1395 = vmatpush1.msra.mxu0 %v1394
      %1396 = vmatprep.subr.mxu0 0.0
      %1397 = vmatpush1.msra.mxu0 0.0
      %1398 = vmatprep.subr.mxu0 0.0
      %1399 = vmatpush1.msra.mxu0 0.0
      %1400 = vmatprep.subr.mxu0 0.0
      %1401 = vmatpush1.msra.mxu0 0.0
      %1402 = vmatprep.subr.mxu0 0.0
      %1403 = vmatpush1.msra.mxu0 0.0
      %1404 = vmatprep.subr.mxu0 0.0
      %1405 = vmatpush1.msra.mxu0 0.0
      %1406 = vmatprep.subr.mxu0 0.0
      %1407 = vmatpush1.msra.mxu0 0.0
      %1408 = vmatprep.subr.mxu0 0.0
      %1409 = vmatpush1.msra.mxu0 0.0
      %1410 = vmatprep.subr.mxu0 0.0
      %1411 = vmatpush1.msra.mxu0 0.0
      %1412 = vmatprep.subr.mxu0 0.0
      %1413 = vmatpush1.msra.mxu0 0.0
      %1414 = vmatprep.subr.mxu0 0.0
      %1415 = vmatpush1.msra.mxu0 0.0
      %1416 = vmatprep.subr.mxu0 0.0
      %1417 = vmatpush1.msra.mxu0 0.0
      %1418 = vmatprep.subr.mxu0 0.0
      %1419 = vmatpush1.msra.mxu0 0.0
      %1420 = vmatprep.subr.mxu0 0.0
      %1421 = vmatpush1.msra.mxu0 0.0
      %1422 = vmatprep.subr.mxu0 0.0
      %1423 = vmatpush1.msra.mxu0 0.0
      %1424 = vmatprep.subr.mxu0 0.0
      %1425 = vmatpush1.msra.mxu0 0.0
      %1426 = vmatprep.subr.mxu0 0.0
      %1427 = vmatpush1.msra.mxu0 0.0
      %1428 = vmatprep.subr.mxu0 0.0
      %1429 = vmatpush1.msra.mxu0 0.0
      %1430 = vmatprep.subr.mxu0 0.0
      %1431 = vmatpush1.msra.mxu0 0.0
      %1432 = vmatprep.subr.mxu0 0.0
      %1433 = vmatpush1.msra.mxu0 0.0
      %1434 = vmatprep.subr.mxu0 0.0
      %1435 = vmatpush1.msra.mxu0 0.0
      %1436 = vmatprep.subr.mxu0 0.0
      %1437 = vmatpush1.msra.mxu0 0.0
      %1438 = vmatprep.subr.mxu0 0.0
      %1439 = vmatpush1.msra.mxu0 0.0
      %1440 = vmatprep.subr.mxu0 0.0
      %1441 = vmatpush1.msra.mxu0 0.0
      %1442 = vmatprep.mubr.f32.mxu0 0.0
      %v1443 = vand.u32 %v897, 4294901760
      %1444 = vmatmul.mubr.f32.gmra.mrb[0].mxu0 %v1443
      %v1445 = vpop.f32.mrb[0].mxu0
      %v1446 = vadd.f32 %v1366, %v1445
      %v1447 = vpop.f32.mrb[0].mxu0
      %1448 = vdwg.mxu0
      %v1449 = vmax.f32 %v1446, -30.0
      %v1450 = vmin.f32 %v1449, 20.0
      %v1451 = vmul.f32 %v1450, 0.5
      %v1452 = vmul.f32 %v1451, 1.442695
      %v1453 = vpow.pop %v1452
      %v1454 = vld [vmem:[%s289] sm:$0xf]
      %v1456 = vrot.slane %v1454, 4
      %v1458 = vmul.f32 %v1453, %v1456
      %v1460 = vrot.slane %v1458, 4
      %v1462 = vadd.f32 %v1446, %v1460
      %vm1463 = vcmask 519168
      %1464 = vst.msk [vmem:[%s293] sm:$0xf] %vm1463, %v1462
      %p1465 = scmp.lt.s32.totalorder %s18, 1
      %s1466 = scalar_select %p1465, %s18, 1
      %s1467 = smul.addr %s1466, 4
      %s1468 = scalar_lea.vmem %s7, %s1467
      // Predicated region
      $region49: #{stage1_wrapper_forward.1} parent=47 // pred_check
        %p1469 = pneg %p193
      $region50: #{stage1_wrapper_forward.1} parent=47 // pred_check_branch
        %1471 = sbr.rel (%p1469) target = $region52
      $region51: #{stage1_wrapper_forward.1} parent=47 // pred_region
        _
      $region52: #{stage1_wrapper_forward.1} parent=47 // pred_fallthru
        _
    $region48: #{stage1_wrapper_forward.1} parent=5 // pred_fallthru
      _
    %p1472 = scmp.le.s32.totalorder 2, %s13
    // Predicated region
    $region53: #{stage1_wrapper_forward.1} parent=5 // pred_check
      %p1473 = pneg %p1472
    $region54: #{stage1_wrapper_forward.1} parent=5 // pred_check_branch
      %1475 = sbr.rel (%p1473) target = $region56
    $region55: #{stage1_wrapper_forward.1} parent=5 // pred_region
      %s1476 = ssub.s32 %s13, 2
      // Predicated region
      $region57: #{stage1_wrapper_forward.1} parent=55 // pred_check
        %p1477 = pneg %p199
      $region58: #{stage1_wrapper_forward.1} parent=55 // pred_check_branch
        %1479 = sbr.rel (%p1477) target = $region60
      $region59: #{stage1_wrapper_forward.1} parent=55 // pred_region
        %p1480 = scmp.lt.s32.totalorder %s19, 1
        %s1481 = scalar_select %p1480, %s19, 1
        %s1482 = smul.addr %s1481, 4
        %s1483 = scalar_lea.vmem %s7, %s1482
      $region60: #{stage1_wrapper_forward.1} parent=55 // pred_fallthru
        _
    $region56: #{stage1_wrapper_forward.1} parent=5 // pred_fallthru
      _
  $region6: #{stage1_wrapper_forward.1} parent=0 // loop_footer
    %s17 = sadd.s32 1, %s13
  $region7: #{stage1_wrapper_forward.1} parent=0 // loop_footer_branch
    %12 = sbr.rel target = $region3
  $region8: #{stage1_wrapper_forward.1} parent=0 // loop_exit
    _

</llo_original>
